<compile_context>
chip_gen: v6e
topology: v6e:2x2x1
jax: 0.10.0
libtpu: 0.0.40
codegen_flags: <defaults>
</compile_context>

<pallas_src>
import functools

import numpy as np
import jax
import jax.numpy as jnp
from jax import lax
from jax.experimental import pallas as pl
from jax.experimental.pallas import tpu as pltpu


# ----------------------------------------------------------------------------
# helpers
# ----------------------------------------------------------------------------
def _round_up(x, m):
    return ((x + m - 1) // m) * m


def _sss_tiling(n_fft, n_frames):
    """Pick frame/freq tile sizes so per-step VMEM stays well under 32 MiB."""
    n_freq = n_fft // 2 + 1
    nfp = _round_up(n_freq, 128)                       # lane-padded freq width
    # frame tile: the stacked [true;pred] block is (2*tile_nf, n_fft) f32 -> ~<=2 MiB
    budget_rows = (2 * 1024 * 1024) // (2 * n_fft * 4)
    tile_nf = max(8, min(_round_up(n_frames, 8), (budget_rows // 8) * 8, 512))
    nf_pad = _round_up(n_frames, tile_nf)
    # freq tile: the DFT-matrix block is (n_fft, 2*ftile) f32 -> ~<=6 MiB
    budget_cols = (6 * 1024 * 1024) // (2 * n_fft * 4)
    ftile = max(128, min(nfp, (budget_cols // 128) * 128))
    while nfp % ftile:
        ftile -= 128
    return n_freq, nfp, tile_nf, nf_pad, ftile


def _build_wcs(n_fft, n_freq, nfp, ftile):
    """Combined [win*cos | win*sin] DFT matrix, freq-padded and freq-chunked."""
    n = np.arange(n_fft, dtype=np.float64)
    win = 0.5 - 0.5 * np.cos(2.0 * np.pi * n / n_fft)      # periodic hann
    norm = np.sqrt(np.sum(win ** 2))                        # torchaudio normalized=True
    k = np.arange(n_freq, dtype=np.float64)
    ang = 2.0 * np.pi * np.outer(n, k) / n_fft
    wc = np.zeros((n_fft, nfp), np.float32)
    ws = np.zeros((n_fft, nfp), np.float32)
    wc[:, :n_freq] = (win[:, None] * np.cos(ang) / norm).astype(np.float32)
    ws[:, :n_freq] = (win[:, None] * np.sin(ang) / norm).astype(np.float32)
    nfc = nfp // ftile
    # per freq-chunk layout: [cos_chunk_f | sin_chunk_f], each ftile wide
    wcs = np.concatenate(
        [wc.reshape(n_fft, nfc, 1, ftile), ws.reshape(n_fft, nfc, 1, ftile)], axis=2)
    return wcs.reshape(n_fft, nfc * 2 * ftile)


def _frame_stack(x_true, x_pred, n_fft, n_frames, nf_pad, tile_nf):
    """(B,T) -> (B, n_chunks*2*tile_nf, n_fft): per chunk, [true rows ; pred rows]."""
    B = x_true.shape[0]
    ft = x_true[:, : n_frames * n_fft].reshape(B, n_frames, n_fft).astype(jnp.float32)
    fp = x_pred[:, : n_frames * n_fft].reshape(B, n_frames, n_fft).astype(jnp.float32)
    if nf_pad > n_frames:
        pad = ((0, 0), (0, nf_pad - n_frames), (0, 0))
        ft = jnp.pad(ft, pad)
        fp = jnp.pad(fp, pad)
    nchunks = nf_pad // tile_nf
    ft = ft.reshape(B, nchunks, tile_nf, n_fft)
    fp = fp.reshape(B, nchunks, tile_nf, n_fft)
    x = jnp.concatenate([ft, fp], axis=2)                   # (B, nchunks, 2*tile_nf, n_fft)
    return x.reshape(B, nchunks * 2 * tile_nf, n_fft)


# ----------------------------------------------------------------------------
# Pallas kernels
# ----------------------------------------------------------------------------
def _sss_kernel(frames_ref, wcs_ref, out_ref, acc_d, acc_s, acc_l, *,
                n_frames, n_freq, tile_nf, ftile, eps):
    """Single-scale spectral loss, one (batch, frame-chunk, freq-chunk) grid step."""
    c = pl.program_id(1)
    f = pl.program_id(2)
    nc = pl.num_programs(1)
    nf = pl.num_programs(2)

    @pl.when(jnp.logical_and(c == 0, f == 0))
    def _():
        acc_d[...] = jnp.zeros_like(acc_d)
        acc_s[...] = jnp.zeros_like(acc_s)
        acc_l[...] = jnp.zeros_like(acc_l)

    x = frames_ref[0]                                   # (2*tile_nf, n_fft): [true;pred]
    # one MXU matmul gives re/im for both true and pred frames of this tile
    s = jnp.dot(x, wcs_ref[...], preferred_element_type=jnp.float32)  # (2*tile_nf, 2*ftile)
    re = s[:, :ftile]
    im = s[:, ftile:]
    mag = jnp.sqrt(re * re + im * im) + eps
    mt = mag[:tile_nf]                                  # |STFT(true)| + eps
    mp = mag[tile_nf:]                                  # |STFT(pred)| + eps

    diff = mt - mp
    ssum = mt + mp
    # padded frame rows / freq cols give mt == mp == eps -> diff == 0, logdiff == 0,
    # but ssum == 2*eps, so only the sum-norm needs masking.
    row = c * tile_nf + lax.broadcasted_iota(jnp.int32, (tile_nf, ftile), 0)
    col = f * ftile + lax.broadcasted_iota(jnp.int32, (tile_nf, ftile), 1)
    valid = jnp.logical_and(row < n_frames, col < n_freq).astype(jnp.float32)

    acc_d[...] += jnp.sum(diff * diff, keepdims=True)
    acc_s[...] += jnp.sum(ssum * ssum * valid, keepdims=True)
    acc_l[...] += jnp.sum(jnp.abs(jnp.log(mt) - jnp.log(mp)), keepdims=True)

    @pl.when(jnp.logical_and(c == nc - 1, f == nf - 1))
    def _():
        conv = jnp.broadcast_to(jnp.sqrt(acc_d[...]) * lax.rsqrt(acc_s[...]), (2, 128))
        l1 = jnp.broadcast_to(acc_l[...], (2, 128))
        r = lax.broadcasted_iota(jnp.int32, (2, 128), 0)
        out_ref[...] = jnp.where(r == 0, conv, l1)[None]


def _misc_kernel(sig_ref, sh_ref, uv_ref, ap_ref, at_ref, out_ref, *, eps_ampl):
    """Fused UVLoss + AmplLoss per-batch reductions (one batch row per grid step)."""
    sg = sig_ref[0]                                     # (n_frames_uv, block_size)
    sh = sh_ref[0]
    uv = uv_ref[0]                                      # (n_frames_uv, 1)
    uvsq = uv * uv                                      # mask^2 under nearest upsample
    num_sq = jnp.sum(sh * sh * uvsq, keepdims=True)     # ||s_h * mask||^2
    den_sq = jnp.sum(sg * sg * uvsq, keepdims=True)     # ||signal * mask||^2

    ap = ap_ref[0] + eps_ampl                           # (1, F*H)
    at = at_ref[0] + eps_ampl
    d = at - ap
    s = at + ap
    sqd = jnp.sum(d * d, keepdims=True)
    sqs = jnp.sum(s * s, keepdims=True)
    conv = jnp.sqrt(sqd) * lax.rsqrt(sqs)
    l1 = jnp.sum(jnp.abs(jnp.log(ap) - jnp.log(at)), keepdims=True)

    r = lax.broadcasted_iota(jnp.int32, (4, 128), 0)
    num_b = jnp.broadcast_to(jnp.sqrt(num_sq), (4, 128))
    den_b = jnp.broadcast_to(jnp.sqrt(den_sq), (4, 128))
    conv_b = jnp.broadcast_to(conv, (4, 128))
    l1_b = jnp.broadcast_to(l1, (4, 128))
    out = jnp.where(r == 0, num_b,
                    jnp.where(r == 1, den_b,
                              jnp.where(r == 2, conv_b, l1_b)))
    out_ref[...] = out[None]


# ----------------------------------------------------------------------------
# wrappers
# ----------------------------------------------------------------------------
def sss_scale_loss(x_true, x_pred, n_fft, alpha=1.0, eps=1e-7):
    """SSSLoss(n_fft, overlap=0): Spectrogram(power=1, normalized=True, center=False)."""
    B, T = x_true.shape
    n_frames = (T - n_fft) // n_fft + 1                 # hop == n_fft (overlap=0)
    n_freq, nfp, tile_nf, nf_pad, ftile = _sss_tiling(n_fft, n_frames)
    nchunks = nf_pad // tile_nf
    nfchunks = nfp // ftile

    frames = _frame_stack(x_true, x_pred, n_fft, n_frames, nf_pad, tile_nf)
    wcs = jnp.asarray(_build_wcs(n_fft, n_freq, nfp, ftile))

    kern = functools.partial(_sss_kernel, n_frames=n_frames, n_freq=n_freq,
                             tile_nf=tile_nf, ftile=ftile, eps=eps)
    out = pl.pallas_call(
        kern,
        out_shape=jax.ShapeDtypeStruct((B, 2, 128), jnp.float32),
        grid=(B, nchunks, nfchunks),
        in_specs=[
            pl.BlockSpec((1, 2 * tile_nf, n_fft), lambda b, c, f: (b, c, 0)),
            pl.BlockSpec((n_fft, 2 * ftile), lambda b, c, f: (0, f)),
        ],
        out_specs=pl.BlockSpec((1, 2, 128), lambda b, c, f: (b, 0, 0)),
        scratch_shapes=[pltpu.VMEM((1, 1), jnp.float32)] * 3,
        compiler_params=pltpu.CompilerParams(
            dimension_semantics=("parallel", "arbitrary", "arbitrary")),
    )(frames, wcs)

    converge = jnp.mean(out[:, 0, 0])
    log_l1 = jnp.sum(out[:, 1, 0]) / (B * n_frames * n_freq)
    return converge + alpha * log_l1


def rss_loss(x_pred, x_true, n_ffts, alpha=1.0, eps=1e-7):
    """RSSLoss.forward: average SSS loss over the (pre-drawn) random scales."""
    value = 0.0
    for n_fft in n_ffts:
        value = value + sss_scale_loss(x_true, x_pred, int(n_fft), alpha=alpha, eps=eps)
    return value / len(n_ffts)


def uv_ampl_loss(signal, s_h, uv_true, ampl_pred, ampl_true, block_size,
                 eps_uv=1e-5, eps_ampl=1e-5, alpha_ampl=1.0):
    """Fused UVLoss + AmplLoss in one per-batch-parallel pallas_call."""
    B, T = signal.shape
    nfu = uv_true.shape[1]
    assert T == nfu * block_size, "signal length must equal n_frames * block_size"
    sig3 = signal.reshape(B, nfu, block_size).astype(jnp.float32)
    sh3 = s_h.reshape(B, nfu, block_size).astype(jnp.float32)
    uv3 = uv_true.reshape(B, nfu, 1).astype(jnp.float32)
    fh = int(np.prod(ampl_pred.shape[1:]))
    ap = ampl_pred.reshape(B, 1, fh).astype(jnp.float32)
    at = ampl_true.reshape(B, 1, fh).astype(jnp.float32)

    kern = functools.partial(_misc_kernel, eps_ampl=eps_ampl)
    out = pl.pallas_call(
        kern,
        out_shape=jax.ShapeDtypeStruct((B, 4, 128), jnp.float32),
        grid=(B,),
        in_specs=[
            pl.BlockSpec((1, nfu, block_size), lambda b: (b, 0, 0)),
            pl.BlockSpec((1, nfu, block_size), lambda b: (b, 0, 0)),
            pl.BlockSpec((1, nfu, 1), lambda b: (b, 0, 0)),
            pl.BlockSpec((1, 1, fh), lambda b: (b, 0, 0)),
            pl.BlockSpec((1, 1, fh), lambda b: (b, 0, 0)),
        ],
        out_specs=pl.BlockSpec((1, 4, 128), lambda b: (b, 0, 0)),
        compiler_params=pltpu.CompilerParams(dimension_semantics=("parallel",)),
    )(sig3, sh3, uv3, ap, at)

    loss_uv = jnp.mean(out[:, 0, 0] / (out[:, 1, 0] + eps_uv))
    loss_ampl = jnp.mean(out[:, 2, 0]) + alpha_ampl * jnp.sum(out[:, 3, 0]) / (B * fh)
    return loss_uv, loss_ampl


class HybridLoss:
    def __init__(self, block_size, fft_min, fft_max, n_scale,
                 lambda_uv, lambda_ampl, lambda_phase, seed=0):
        self.block_size = block_size
        self.lambda_uv = lambda_uv
        self.lambda_ampl = lambda_ampl
        self.lambda_phase = lambda_phase
        # TODO(synk): RSSLoss re-draws torch.randint(fft_min, fft_max, (n_scale,)) each
        # forward; here the scales are drawn once (shapes must be static for the kernels).
        key = jax.random.PRNGKey(seed)
        self.n_ffts = [int(v) for v in
                       np.asarray(jax.random.randint(key, (n_scale,), fft_min, fft_max))]
        self._forward = jax.jit(self._forward_impl)   # fuse/schedule all small kernels

    def _forward_impl(self, signal, s_h, ampl, x_true, uv_true, ampl_true):
        loss_rss = rss_loss(signal, x_true, self.n_ffts)
        # TODO(synk): original uses ddsp `upsample` (linear interpolation) for the uv
        # mask; nearest/repeat upsampling of the binary mask is used here.
        loss_uv, loss_ampl = uv_ampl_loss(signal, s_h, uv_true, ampl, ampl_true,
                                          self.block_size)
        loss_phase = jnp.float32(0.0)   # matches reference: loss_phase = torch.tensor(0.0)
        loss = (loss_rss + self.lambda_uv * loss_uv
                + self.lambda_ampl * loss_ampl + self.lambda_phase * loss_phase)
        return loss, (loss_rss, loss_uv, loss_ampl, loss_phase)

    def __call__(self, signal, s_h, ampl, phase, x_true, uv_true, ampl_true, phase_true,
                 detach_uv=False, uv_tolerance=0.05):
        # detach_uv / uv_tolerance only affect gradients (detach); forward value unchanged.
        return self._forward(signal, s_h, ampl, x_true, uv_true, ampl_true)


# ----------------------------------------------------------------------------
if __name__ == "__main__":
    key = jax.random.PRNGKey(0)
    ks = jax.random.split(key, 8)

    B = 2
    block_size = 8
    n_frames_uv = 16
    T = block_size * n_frames_uv          # 128 samples
    F_dim, H_dim = 16, 12                  # amplitude / phase feature maps

    signal = jax.random.normal(ks[0], (B, T), jnp.float32)
    s_h = jax.random.normal(ks[1], (B, T), jnp.float32)
    x_true = jax.random.normal(ks[2], (B, T), jnp.float32)
    ampl = jax.nn.softplus(jax.random.normal(ks[3], (B, F_dim, H_dim), jnp.float32))
    ampl_true = jax.nn.softplus(jax.random.normal(ks[4], (B, F_dim, H_dim), jnp.float32))
    phase = jax.random.uniform(ks[5], (B, F_dim, H_dim), jnp.float32, -np.pi, np.pi)
    phase_true = jax.random.uniform(ks[6], (B, F_dim, H_dim), jnp.float32, -np.pi, np.pi)
    uv_true = (jax.random.uniform(ks[7], (B, n_frames_uv)) > 0.5).astype(jnp.float32)

    hybrid = HybridLoss(block_size=block_size, fft_min=16, fft_max=20, n_scale=2,
                        lambda_uv=1.0, lambda_ampl=0.5, lambda_phase=0.1, seed=0)

    loss, (loss_rss, loss_uv, loss_ampl, loss_phase) = hybrid(
        signal, s_h, ampl, phase, x_true, uv_true, ampl_true, phase_true)

    jax.block_until_ready(loss)
    jax.block_until_ready(loss_rss)
    jax.block_until_ready(loss_uv)
    jax.block_until_ready(loss_ampl)
    assert np.isfinite(float(loss))
    print("KERNEL_OK")
</pallas_src>

<mosaic_0001>
module attributes {stable_mosaic.version = 11 : i64} {
  func.func @_misc_kernel(%arg0: i32, %arg1: memref<1x16x8xf32, #tpu.memory_space<vmem>>, %arg2: memref<1x16x8xf32, #tpu.memory_space<vmem>>, %arg3: memref<1x16x1xf32, #tpu.memory_space<vmem>>, %arg4: memref<1x1x192xf32, #tpu.memory_space<vmem>>, %arg5: memref<1x1x192xf32, #tpu.memory_space<vmem>>, %arg6: memref<1x4x128xf32, #tpu.memory_space<vmem>>) attributes {dimension_semantics = [#tpu.dimension_semantics<parallel>], iteration_bounds = array<i64: 2>, scalar_prefetch = 0 : i64, scratch_operands = 0 : i64, tpu.core_type = #tpu.core_type<tc>, window_params = [{transform_indices = @transform_0, window_bounds = array<i64: 1, 16, 8>}, {transform_indices = @transform_1, window_bounds = array<i64: 1, 16, 8>}, {transform_indices = @transform_2, window_bounds = array<i64: 1, 16, 1>}, {transform_indices = @transform_3, window_bounds = array<i64: 1, 1, 192>}, {transform_indices = @transform_4, window_bounds = array<i64: 1, 1, 192>}, {transform_indices = @transform_5, window_bounds = array<i64: 1, 4, 128>}]} {
    %c0 = arith.constant 0 : index
    %c0_0 = arith.constant 0 : index
    %c0_1 = arith.constant 0 : index
    %0 = vector.load %arg1[%c0, %c0_0, %c0_1] : memref<1x16x8xf32, #tpu.memory_space<vmem>>, vector<1x16x8xf32>
    %1 = vector.shape_cast %0 : vector<1x16x8xf32> to vector<16x8xf32>
    %c0_2 = arith.constant 0 : index
    %c0_3 = arith.constant 0 : index
    %c0_4 = arith.constant 0 : index
    %2 = vector.load %arg2[%c0_2, %c0_3, %c0_4] : memref<1x16x8xf32, #tpu.memory_space<vmem>>, vector<1x16x8xf32>
    %3 = vector.shape_cast %2 : vector<1x16x8xf32> to vector<16x8xf32>
    %c0_5 = arith.constant 0 : index
    %c0_6 = arith.constant 0 : index
    %c0_7 = arith.constant 0 : index
    %4 = vector.load %arg3[%c0_5, %c0_6, %c0_7] : memref<1x16x1xf32, #tpu.memory_space<vmem>>, vector<1x16x1xf32>
    %5 = vector.shape_cast %4 : vector<1x16x1xf32> to vector<16x1xf32>
    %6 = arith.mulf %5, %5 : vector<16x1xf32>
    %7 = arith.mulf %3, %3 : vector<16x8xf32>
    %8 = vector.broadcast %6 : vector<16x1xf32> to vector<16x8xf32>
    %9 = arith.mulf %7, %8 : vector<16x8xf32>
    %10 = vector.shape_cast %9 : vector<16x8xf32> to vector<1x16x8xf32>
    %cst = arith.constant dense<0.000000e+00> : vector<1xf32>
    %11 = vector.multi_reduction <add>, %10, %cst [1, 2] : vector<1x16x8xf32> to vector<1xf32>
    %12 = vector.shape_cast %11 : vector<1xf32> to vector<1x1x1xf32>
    %13 = vector.extract %12[0, 0, 0] : f32 from vector<1x1x1xf32>
    %14 = vector.broadcast %13 : f32 to vector<1x1xf32>
    %15 = arith.mulf %1, %1 : vector<16x8xf32>
    %16 = vector.broadcast %6 : vector<16x1xf32> to vector<16x8xf32>
    %17 = arith.mulf %15, %16 : vector<16x8xf32>
    %18 = vector.shape_cast %17 : vector<16x8xf32> to vector<1x16x8xf32>
    %cst_8 = arith.constant dense<0.000000e+00> : vector<1xf32>
    %19 = vector.multi_reduction <add>, %18, %cst_8 [1, 2] : vector<1x16x8xf32> to vector<1xf32>
    %20 = vector.shape_cast %19 : vector<1xf32> to vector<1x1x1xf32>
    %21 = vector.extract %20[0, 0, 0] : f32 from vector<1x1x1xf32>
    %22 = vector.broadcast %21 : f32 to vector<1x1xf32>
    %c0_9 = arith.constant 0 : index
    %c0_10 = arith.constant 0 : index
    %c0_11 = arith.constant 0 : index
    %23 = vector.load %arg4[%c0_9, %c0_10, %c0_11] : memref<1x1x192xf32, #tpu.memory_space<vmem>>, vector<1x1x192xf32>
    %24 = vector.shape_cast %23 : vector<1x1x192xf32> to vector<1x192xf32>
    %cst_12 = arith.constant 9.99999974E-6 : f32
    %25 = vector.broadcast %cst_12 : f32 to vector<1x192xf32>
    %26 = arith.addf %24, %25 : vector<1x192xf32>
    %c0_13 = arith.constant 0 : index
    %c0_14 = arith.constant 0 : index
    %c0_15 = arith.constant 0 : index
    %27 = vector.load %arg5[%c0_13, %c0_14, %c0_15] : memref<1x1x192xf32, #tpu.memory_space<vmem>>, vector<1x1x192xf32>
    %28 = vector.shape_cast %27 : vector<1x1x192xf32> to vector<1x192xf32>
    %cst_16 = arith.constant 9.99999974E-6 : f32
    %29 = vector.broadcast %cst_16 : f32 to vector<1x192xf32>
    %30 = arith.addf %28, %29 : vector<1x192xf32>
    %31 = arith.subf %30, %26 : vector<1x192xf32>
    %32 = arith.addf %30, %26 : vector<1x192xf32>
    %33 = arith.mulf %31, %31 : vector<1x192xf32>
    %34 = vector.shape_cast %33 : vector<1x192xf32> to vector<1x1x192xf32>
    %cst_17 = arith.constant dense<0.000000e+00> : vector<1xf32>
    %35 = vector.multi_reduction <add>, %34, %cst_17 [1, 2] : vector<1x1x192xf32> to vector<1xf32>
    %36 = vector.shape_cast %35 : vector<1xf32> to vector<1x1x1xf32>
    %37 = vector.extract %36[0, 0, 0] : f32 from vector<1x1x1xf32>
    %38 = vector.broadcast %37 : f32 to vector<1x1xf32>
    %39 = arith.mulf %32, %32 : vector<1x192xf32>
    %40 = vector.shape_cast %39 : vector<1x192xf32> to vector<1x1x192xf32>
    %cst_18 = arith.constant dense<0.000000e+00> : vector<1xf32>
    %41 = vector.multi_reduction <add>, %40, %cst_18 [1, 2] : vector<1x1x192xf32> to vector<1xf32>
    %42 = vector.shape_cast %41 : vector<1xf32> to vector<1x1x1xf32>
    %43 = vector.extract %42[0, 0, 0] : f32 from vector<1x1x1xf32>
    %44 = vector.broadcast %43 : f32 to vector<1x1xf32>
    %45 = math.sqrt %38 : vector<1x1xf32>
    %46 = math.rsqrt %44 : vector<1x1xf32>
    %47 = arith.mulf %45, %46 : vector<1x1xf32>
    %48 = math.log %26 : vector<1x192xf32>
    %49 = math.log %30 : vector<1x192xf32>
    %50 = arith.subf %48, %49 : vector<1x192xf32>
    %51 = math.absf %50 : vector<1x192xf32>
    %52 = vector.shape_cast %51 : vector<1x192xf32> to vector<1x1x192xf32>
    %cst_19 = arith.constant dense<0.000000e+00> : vector<1xf32>
    %53 = vector.multi_reduction <add>, %52, %cst_19 [1, 2] : vector<1x1x192xf32> to vector<1xf32>
    %54 = vector.shape_cast %53 : vector<1xf32> to vector<1x1x1xf32>
    %55 = vector.extract %54[0, 0, 0] : f32 from vector<1x1x1xf32>
    %56 = vector.broadcast %55 : f32 to vector<1x1xf32>
    %57 = tpu.iota {dimensions = array<i32: 0>} : vector<4x128xi32>
    %58 = math.sqrt %14 : vector<1x1xf32>
    %59 = vector.shape_cast %58 : vector<1x1xf32> to vector<1x1xf32>
    %60 = vector.broadcast %59 : vector<1x1xf32> to vector<4x128xf32>
    %61 = math.sqrt %22 : vector<1x1xf32>
    %62 = vector.shape_cast %61 : vector<1x1xf32> to vector<1x1xf32>
    %63 = vector.broadcast %62 : vector<1x1xf32> to vector<4x128xf32>
    %64 = vector.shape_cast %47 : vector<1x1xf32> to vector<1x1xf32>
    %65 = vector.broadcast %64 : vector<1x1xf32> to vector<4x128xf32>
    %66 = vector.shape_cast %56 : vector<1x1xf32> to vector<1x1xf32>
    %67 = vector.broadcast %66 : vector<1x1xf32> to vector<4x128xf32>
    %c0_i32 = arith.constant 0 : i32
    %68 = vector.broadcast %c0_i32 : i32 to vector<4x128xi32>
    %69 = arith.cmpi eq, %57, %68 : vector<4x128xi32>
    %c1_i32 = arith.constant 1 : i32
    %70 = vector.broadcast %c1_i32 : i32 to vector<4x128xi32>
    %71 = arith.cmpi eq, %57, %70 : vector<4x128xi32>
    %c2_i32 = arith.constant 2 : i32
    %72 = vector.broadcast %c2_i32 : i32 to vector<4x128xi32>
    %73 = arith.cmpi eq, %57, %72 : vector<4x128xi32>
    %74 = arith.select %73, %65, %67 : vector<4x128xi1>, vector<4x128xf32>
    %75 = arith.select %71, %63, %74 : vector<4x128xi1>, vector<4x128xf32>
    %76 = arith.select %69, %60, %75 : vector<4x128xi1>, vector<4x128xf32>
    %77 = vector.shape_cast %76 : vector<4x128xf32> to vector<1x4x128xf32>
    %c0_20 = arith.constant 0 : index
    %c0_21 = arith.constant 0 : index
    %c0_22 = arith.constant 0 : index
    %78 = vector.load %arg6[%c0_20, %c0_21, %c0_22] : memref<1x4x128xf32, #tpu.memory_space<vmem>>, vector<1x4x128xf32>
    tpu.vector_store %arg6[%c0_20, %c0_21, %c0_22], %77 {strides = array<i32>} : memref<1x4x128xf32, #tpu.memory_space<vmem>>, vector<1x4x128xf32>,
    return
  }
  func.func @transform_0(%arg0: i32) -> (i32, i32, i32) {
    %c0_i32 = arith.constant 0 : i32
    %c0_i32_0 = arith.constant 0 : i32
    %c0_i32_1 = arith.constant 0 : i32
    return %arg0, %c0_i32, %c0_i32_0 : i32, i32, i32
  }
  func.func @transform_1(%arg0: i32) -> (i32, i32, i32) {
    %c0_i32 = arith.constant 0 : i32
    %c0_i32_0 = arith.constant 0 : i32
    %c0_i32_1 = arith.constant 0 : i32
    return %arg0, %c0_i32, %c0_i32_0 : i32, i32, i32
  }
  func.func @transform_2(%arg0: i32) -> (i32, i32, i32) {
    %c0_i32 = arith.constant 0 : i32
    %c0_i32_0 = arith.constant 0 : i32
    %c0_i32_1 = arith.constant 0 : i32
    return %arg0, %c0_i32, %c0_i32_0 : i32, i32, i32
  }
  func.func @transform_3(%arg0: i32) -> (i32, i32, i32) {
    %c0_i32 = arith.constant 0 : i32
    %c0_i32_0 = arith.constant 0 : i32
    %c0_i32_1 = arith.constant 0 : i32
    return %arg0, %c0_i32, %c0_i32_0 : i32, i32, i32
  }
  func.func @transform_4(%arg0: i32) -> (i32, i32, i32) {
    %c0_i32 = arith.constant 0 : i32
    %c0_i32_0 = arith.constant 0 : i32
    %c0_i32_1 = arith.constant 0 : i32
    return %arg0, %c0_i32, %c0_i32_0 : i32, i32, i32
  }
  func.func @transform_5(%arg0: i32) -> (i32, i32, i32) {
    %c0_i32 = arith.constant 0 : i32
    %c0_i32_0 = arith.constant 0 : i32
    %c0_i32_1 = arith.constant 0 : i32
    return %arg0, %c0_i32, %c0_i32_0 : i32, i32, i32
  }
}

module attributes {stable_mosaic.version = 11 : i64} {
  func.func @_sss_kernel(%arg0: i32, %arg1: i32, %arg2: i32, %arg3: memref<1x16x16xf32, #tpu.memory_space<vmem>>, %arg4: memref<16x256xf32, #tpu.memory_space<vmem>>, %arg5: memref<1x2x128xf32, #tpu.memory_space<vmem>>, %arg6: memref<1x1xf32, #tpu.memory_space<vmem>>, %arg7: memref<1x1xf32, #tpu.memory_space<vmem>>, %arg8: memref<1x1xf32, #tpu.memory_space<vmem>>) attributes {dimension_semantics = [#tpu.dimension_semantics<parallel>, #tpu.dimension_semantics<arbitrary>, #tpu.dimension_semantics<arbitrary>], iteration_bounds = array<i64: 2, 1, 1>, scalar_prefetch = 0 : i64, scratch_operands = 3 : i64, tpu.core_type = #tpu.core_type<tc>, window_params = [{transform_indices = @transform_0, window_bounds = array<i64: 1, 16, 16>}, {transform_indices = @transform_1, window_bounds = array<i64: 16, 256>}, {transform_indices = @transform_2, window_bounds = array<i64: 1, 2, 128>}]} {
    %c0_i32 = arith.constant 0 : i32
    %0 = arith.cmpi eq, %arg1, %c0_i32 : i32
    %c0_i32_0 = arith.constant 0 : i32
    %1 = arith.cmpi eq, %arg2, %c0_i32_0 : i32
    %2 = arith.andi %0, %1 : i1
    %3 = arith.extui %2 : i1 to i32
    %c0_i32_1 = arith.constant 0 : i32
    %4 = arith.cmpi ne, %3, %c0_i32_1 : i32
    scf.if %4 {
      %cst_26 = arith.constant 0.000000e+00 : f32
      %72 = vector.broadcast %cst_26 : f32 to vector<1x1xf32>
      %c0_27 = arith.constant 0 : index
      %c0_28 = arith.constant 0 : index
      %73 = vector.load %arg6[%c0_27, %c0_28] : memref<1x1xf32, #tpu.memory_space<vmem>>, vector<1x1xf32>
      tpu.vector_store %arg6[%c0_27, %c0_28], %72 {strides = array<i32>} : memref<1x1xf32, #tpu.memory_space<vmem>>, vector<1x1xf32>,
      %cst_29 = arith.constant 0.000000e+00 : f32
      %74 = vector.broadcast %cst_29 : f32 to vector<1x1xf32>
      %c0_30 = arith.constant 0 : index
      %c0_31 = arith.constant 0 : index
      %75 = vector.load %arg7[%c0_30, %c0_31] : memref<1x1xf32, #tpu.memory_space<vmem>>, vector<1x1xf32>
      tpu.vector_store %arg7[%c0_30, %c0_31], %74 {strides = array<i32>} : memref<1x1xf32, #tpu.memory_space<vmem>>, vector<1x1xf32>,
      %cst_32 = arith.constant 0.000000e+00 : f32
      %76 = vector.broadcast %cst_32 : f32 to vector<1x1xf32>
      %c0_33 = arith.constant 0 : index
      %c0_34 = arith.constant 0 : index
      %77 = vector.load %arg8[%c0_33, %c0_34] : memref<1x1xf32, #tpu.memory_space<vmem>>, vector<1x1xf32>
      tpu.vector_store %arg8[%c0_33, %c0_34], %76 {strides = array<i32>} : memref<1x1xf32, #tpu.memory_space<vmem>>, vector<1x1xf32>,
    } else {
    }
    %c0 = arith.constant 0 : index
    %c0_2 = arith.constant 0 : index
    %c0_3 = arith.constant 0 : index
    %5 = vector.load %arg3[%c0, %c0_2, %c0_3] : memref<1x16x16xf32, #tpu.memory_space<vmem>>, vector<1x16x16xf32>
    %6 = vector.shape_cast %5 : vector<1x16x16xf32> to vector<16x16xf32>
    %c0_4 = arith.constant 0 : index
    %c0_5 = arith.constant 0 : index
    %7 = vector.load %arg4[%c0_4, %c0_5] : memref<16x256xf32, #tpu.memory_space<vmem>>, vector<16x256xf32>
    %cst = arith.constant dense<0.000000e+00> : vector<16x256xf32>
    %8 = tpu.matmul %6, %7, %cst {dimension_numbers = #tpu.dot_dimension_numbers<[1], [0], [0], [1], [0, 0, 1, 1], [], []>} : vector<16x16xf32>, vector<16x256xf32>, vector<16x256xf32> -> vector<16x256xf32>
    %9 = vector.extract_strided_slice %8 {offsets = [0, 0], sizes = [16, 128], strides = [1, 1]} : vector<16x256xf32> to vector<16x128xf32>
    %10 = vector.extract_strided_slice %8 {offsets = [0, 128], sizes = [16, 128], strides = [1, 1]} : vector<16x256xf32> to vector<16x128xf32>
    %11 = arith.mulf %9, %9 : vector<16x128xf32>
    %12 = arith.mulf %10, %10 : vector<16x128xf32>
    %13 = arith.addf %11, %12 : vector<16x128xf32>
    %14 = math.sqrt %13 : vector<16x128xf32>
    %cst_6 = arith.constant 1.000000e-07 : f32
    %15 = vector.broadcast %cst_6 : f32 to vector<16x128xf32>
    %16 = arith.addf %14, %15 : vector<16x128xf32>
    %17 = vector.extract_strided_slice %16 {offsets = [0, 0], sizes = [8, 128], strides = [1, 1]} : vector<16x128xf32> to vector<8x128xf32>
    %18 = vector.extract_strided_slice %16 {offsets = [8, 0], sizes = [8, 128], strides = [1, 1]} : vector<16x128xf32> to vector<8x128xf32>
    %19 = arith.subf %17, %18 : vector<8x128xf32>
    %20 = arith.addf %17, %18 : vector<8x128xf32>
    %c8_i32 = arith.constant 8 : i32
    %21 = arith.muli %arg1, %c8_i32 : i32
    %22 = tpu.iota {dimensions = array<i32: 0>} : vector<8x128xi32>
    %23 = vector.broadcast %21 : i32 to vector<8x128xi32>
    %24 = arith.addi %23, %22 : vector<8x128xi32>
    %c128_i32 = arith.constant 128 : i32
    %25 = arith.muli %arg2, %c128_i32 : i32
    %26 = tpu.iota {dimensions = array<i32: 1>} : vector<8x128xi32>
    %27 = vector.broadcast %25 : i32 to vector<8x128xi32>
    %28 = arith.addi %27, %26 : vector<8x128xi32>
    %c8_i32_7 = arith.constant 8 : i32
    %29 = vector.broadcast %c8_i32_7 : i32 to vector<8x128xi32>
    %30 = arith.cmpi slt, %24, %29 : vector<8x128xi32>
    %c9_i32 = arith.constant 9 : i32
    %31 = vector.broadcast %c9_i32 : i32 to vector<8x128xi32>
    %32 = arith.cmpi slt, %28, %31 : vector<8x128xi32>
    %33 = arith.andi %30, %32 : vector<8x128xi1>
    %34 = arith.extui %33 : vector<8x128xi1> to vector<8x128xi32>
    %35 = arith.sitofp %34 : vector<8x128xi32> to vector<8x128xf32>
    %c0_8 = arith.constant 0 : index
    %c0_9 = arith.constant 0 : index
    %36 = vector.load %arg6[%c0_8, %c0_9] : memref<1x1xf32, #tpu.memory_space<vmem>>, vector<1x1xf32>
    %37 = arith.mulf %19, %19 : vector<8x128xf32>
    %38 = vector.shape_cast %37 : vector<8x128xf32> to vector<1x8x128xf32>
    %cst_10 = arith.constant dense<0.000000e+00> : vector<1xf32>
    %39 = vector.multi_reduction <add>, %38, %cst_10 [1, 2] : vector<1x8x128xf32> to vector<1xf32>
    %40 = vector.shape_cast %39 : vector<1xf32> to vector<1x1x1xf32>
    %41 = vector.extract %40[0, 0, 0] : f32 from vector<1x1x1xf32>
    %42 = vector.broadcast %41 : f32 to vector<1x1xf32>
    %43 = arith.addf %36, %42 : vector<1x1xf32>
    %c0_11 = arith.constant 0 : index
    %c0_12 = arith.constant 0 : index
    %44 = vector.load %arg6[%c0_11, %c0_12] : memref<1x1xf32, #tpu.memory_space<vmem>>, vector<1x1xf32>
    tpu.vector_store %arg6[%c0_11, %c0_12], %43 {strides = array<i32>} : memref<1x1xf32, #tpu.memory_space<vmem>>, vector<1x1xf32>,
    %c0_13 = arith.constant 0 : index
    %c0_14 = arith.constant 0 : index
    %45 = vector.load %arg7[%c0_13, %c0_14] : memref<1x1xf32, #tpu.memory_space<vmem>>, vector<1x1xf32>
    %46 = arith.mulf %20, %20 : vector<8x128xf32>
    %47 = arith.mulf %46, %35 : vector<8x128xf32>
    %48 = vector.shape_cast %47 : vector<8x128xf32> to vector<1x8x128xf32>
    %cst_15 = arith.constant dense<0.000000e+00> : vector<1xf32>
    %49 = vector.multi_reduction <add>, %48, %cst_15 [1, 2] : vector<1x8x128xf32> to vector<1xf32>
    %50 = vector.shape_cast %49 : vector<1xf32> to vector<1x1x1xf32>
    %51 = vector.extract %50[0, 0, 0] : f32 from vector<1x1x1xf32>
    %52 = vector.broadcast %51 : f32 to vector<1x1xf32>
    %53 = arith.addf %45, %52 : vector<1x1xf32>
    %c0_16 = arith.constant 0 : index
    %c0_17 = arith.constant 0 : index
    %54 = vector.load %arg7[%c0_16, %c0_17] : memref<1x1xf32, #tpu.memory_space<vmem>>, vector<1x1xf32>
    tpu.vector_store %arg7[%c0_16, %c0_17], %53 {strides = array<i32>} : memref<1x1xf32, #tpu.memory_space<vmem>>, vector<1x1xf32>,
    %c0_18 = arith.constant 0 : index
    %c0_19 = arith.constant 0 : index
    %55 = vector.load %arg8[%c0_18, %c0_19] : memref<1x1xf32, #tpu.memory_space<vmem>>, vector<1x1xf32>
    %56 = math.log %17 : vector<8x128xf32>
    %57 = math.log %18 : vector<8x128xf32>
    %58 = arith.subf %56, %57 : vector<8x128xf32>
    %59 = math.absf %58 : vector<8x128xf32>
    %60 = vector.shape_cast %59 : vector<8x128xf32> to vector<1x8x128xf32>
    %cst_20 = arith.constant dense<0.000000e+00> : vector<1xf32>
    %61 = vector.multi_reduction <add>, %60, %cst_20 [1, 2] : vector<1x8x128xf32> to vector<1xf32>
    %62 = vector.shape_cast %61 : vector<1xf32> to vector<1x1x1xf32>
    %63 = vector.extract %62[0, 0, 0] : f32 from vector<1x1x1xf32>
    %64 = vector.broadcast %63 : f32 to vector<1x1xf32>
    %65 = arith.addf %55, %64 : vector<1x1xf32>
    %c0_21 = arith.constant 0 : index
    %c0_22 = arith.constant 0 : index
    %66 = vector.load %arg8[%c0_21, %c0_22] : memref<1x1xf32, #tpu.memory_space<vmem>>, vector<1x1xf32>
    tpu.vector_store %arg8[%c0_21, %c0_22], %65 {strides = array<i32>} : memref<1x1xf32, #tpu.memory_space<vmem>>, vector<1x1xf32>,
    %c0_i32_23 = arith.constant 0 : i32
    %67 = arith.cmpi eq, %arg1, %c0_i32_23 : i32
    %c0_i32_24 = arith.constant 0 : i32
    %68 = arith.cmpi eq, %arg2, %c0_i32_24 : i32
    %69 = arith.andi %67, %68 : i1
    %70 = arith.extui %69 : i1 to i32
    %c0_i32_25 = arith.constant 0 : i32
    %71 = arith.cmpi ne, %70, %c0_i32_25 : i32
    scf.if %71 {
      %c0_26 = arith.constant 0 : index
      %c0_27 = arith.constant 0 : index
      %72 = vector.load %arg6[%c0_26, %c0_27] : memref<1x1xf32, #tpu.memory_space<vmem>>, vector<1x1xf32>
      %73 = math.sqrt %72 : vector<1x1xf32>
      %c0_28 = arith.constant 0 : index
      %c0_29 = arith.constant 0 : index
      %74 = vector.load %arg7[%c0_28, %c0_29] : memref<1x1xf32, #tpu.memory_space<vmem>>, vector<1x1xf32>
      %75 = math.rsqrt %74 : vector<1x1xf32>
      %76 = arith.mulf %73, %75 : vector<1x1xf32>
      %77 = vector.shape_cast %76 : vector<1x1xf32> to vector<1x1xf32>
      %78 = vector.broadcast %77 : vector<1x1xf32> to vector<2x128xf32>
      %c0_30 = arith.constant 0 : index
      %c0_31 = arith.constant 0 : index
      %79 = vector.load %arg8[%c0_30, %c0_31] : memref<1x1xf32, #tpu.memory_space<vmem>>, vector<1x1xf32>
      %80 = vector.shape_cast %79 : vector<1x1xf32> to vector<1x1xf32>
      %81 = vector.broadcast %80 : vector<1x1xf32> to vector<2x128xf32>
      %82 = tpu.iota {dimensions = array<i32: 0>} : vector<2x128xi32>
      %c0_i32_32 = arith.constant 0 : i32
      %83 = vector.broadcast %c0_i32_32 : i32 to vector<2x128xi32>
      %84 = arith.cmpi eq, %82, %83 : vector<2x128xi32>
      %85 = arith.select %84, %78, %81 : vector<2x128xi1>, vector<2x128xf32>
      %86 = vector.shape_cast %85 : vector<2x128xf32> to vector<1x2x128xf32>
      %c0_33 = arith.constant 0 : index
      %c0_34 = arith.constant 0 : index
      %c0_35 = arith.constant 0 : index
      %87 = vector.load %arg5[%c0_33, %c0_34, %c0_35] : memref<1x2x128xf32, #tpu.memory_space<vmem>>, vector<1x2x128xf32>
      tpu.vector_store %arg5[%c0_33, %c0_34, %c0_35], %86 {strides = array<i32>} : memref<1x2x128xf32, #tpu.memory_space<vmem>>, vector<1x2x128xf32>,
    } else {
    }
    return
  }
  func.func @transform_0(%arg0: i32, %arg1: i32, %arg2: i32) -> (i32, i32, i32) {
    %c0_i32 = arith.constant 0 : i32
    %c0_i32_0 = arith.constant 0 : i32
    return %arg0, %arg1, %c0_i32 : i32, i32, i32
  }
  func.func @transform_1(%arg0: i32, %arg1: i32, %arg2: i32) -> (i32, i32) {
    %c0_i32 = arith.constant 0 : i32
    %c0_i32_0 = arith.constant 0 : i32
    return %c0_i32, %arg2 : i32, i32
  }
  func.func @transform_2(%arg0: i32, %arg1: i32, %arg2: i32) -> (i32, i32, i32) {
    %c0_i32 = arith.constant 0 : i32
    %c0_i32_0 = arith.constant 0 : i32
    %c0_i32_1 = arith.constant 0 : i32
    return %arg0, %c0_i32, %c0_i32_0 : i32, i32, i32
  }
}

module attributes {stable_mosaic.version = 11 : i64} {
  func.func @_sss_kernel(%arg0: i32, %arg1: i32, %arg2: i32, %arg3: memref<1x16x17xf32, #tpu.memory_space<vmem>>, %arg4: memref<17x256xf32, #tpu.memory_space<vmem>>, %arg5: memref<1x2x128xf32, #tpu.memory_space<vmem>>, %arg6: memref<1x1xf32, #tpu.memory_space<vmem>>, %arg7: memref<1x1xf32, #tpu.memory_space<vmem>>, %arg8: memref<1x1xf32, #tpu.memory_space<vmem>>) attributes {dimension_semantics = [#tpu.dimension_semantics<parallel>, #tpu.dimension_semantics<arbitrary>, #tpu.dimension_semantics<arbitrary>], iteration_bounds = array<i64: 2, 1, 1>, scalar_prefetch = 0 : i64, scratch_operands = 3 : i64, tpu.core_type = #tpu.core_type<tc>, window_params = [{transform_indices = @transform_0, window_bounds = array<i64: 1, 16, 17>}, {transform_indices = @transform_1, window_bounds = array<i64: 17, 256>}, {transform_indices = @transform_2, window_bounds = array<i64: 1, 2, 128>}]} {
    %c0_i32 = arith.constant 0 : i32
    %0 = arith.cmpi eq, %arg1, %c0_i32 : i32
    %c0_i32_0 = arith.constant 0 : i32
    %1 = arith.cmpi eq, %arg2, %c0_i32_0 : i32
    %2 = arith.andi %0, %1 : i1
    %3 = arith.extui %2 : i1 to i32
    %c0_i32_1 = arith.constant 0 : i32
    %4 = arith.cmpi ne, %3, %c0_i32_1 : i32
    scf.if %4 {
      %cst_25 = arith.constant 0.000000e+00 : f32
      %72 = vector.broadcast %cst_25 : f32 to vector<1x1xf32>
      %c0_26 = arith.constant 0 : index
      %c0_27 = arith.constant 0 : index
      %73 = vector.load %arg6[%c0_26, %c0_27] : memref<1x1xf32, #tpu.memory_space<vmem>>, vector<1x1xf32>
      tpu.vector_store %arg6[%c0_26, %c0_27], %72 {strides = array<i32>} : memref<1x1xf32, #tpu.memory_space<vmem>>, vector<1x1xf32>,
      %cst_28 = arith.constant 0.000000e+00 : f32
      %74 = vector.broadcast %cst_28 : f32 to vector<1x1xf32>
      %c0_29 = arith.constant 0 : index
      %c0_30 = arith.constant 0 : index
      %75 = vector.load %arg7[%c0_29, %c0_30] : memref<1x1xf32, #tpu.memory_space<vmem>>, vector<1x1xf32>
      tpu.vector_store %arg7[%c0_29, %c0_30], %74 {strides = array<i32>} : memref<1x1xf32, #tpu.memory_space<vmem>>, vector<1x1xf32>,
      %cst_31 = arith.constant 0.000000e+00 : f32
      %76 = vector.broadcast %cst_31 : f32 to vector<1x1xf32>
      %c0_32 = arith.constant 0 : index
      %c0_33 = arith.constant 0 : index
      %77 = vector.load %arg8[%c0_32, %c0_33] : memref<1x1xf32, #tpu.memory_space<vmem>>, vector<1x1xf32>
      tpu.vector_store %arg8[%c0_32, %c0_33], %76 {strides = array<i32>} : memref<1x1xf32, #tpu.memory_space<vmem>>, vector<1x1xf32>,
    } else {
    }
    %c0 = arith.constant 0 : index
    %c0_2 = arith.constant 0 : index
    %c0_3 = arith.constant 0 : index
    %5 = vector.load %arg3[%c0, %c0_2, %c0_3] : memref<1x16x17xf32, #tpu.memory_space<vmem>>, vector<1x16x17xf32>
    %6 = vector.shape_cast %5 : vector<1x16x17xf32> to vector<16x17xf32>
    %c0_4 = arith.constant 0 : index
    %c0_5 = arith.constant 0 : index
    %7 = vector.load %arg4[%c0_4, %c0_5] : memref<17x256xf32, #tpu.memory_space<vmem>>, vector<17x256xf32>
    %cst = arith.constant dense<0.000000e+00> : vector<16x256xf32>
    %8 = tpu.matmul %6, %7, %cst {dimension_numbers = #tpu.dot_dimension_numbers<[1], [0], [0], [1], [0, 0, 1, 1], [], []>} : vector<16x17xf32>, vector<17x256xf32>, vector<16x256xf32> -> vector<16x256xf32>
    %9 = vector.extract_strided_slice %8 {offsets = [0, 0], sizes = [16, 128], strides = [1, 1]} : vector<16x256xf32> to vector<16x128xf32>
    %10 = vector.extract_strided_slice %8 {offsets = [0, 128], sizes = [16, 128], strides = [1, 1]} : vector<16x256xf32> to vector<16x128xf32>
    %11 = arith.mulf %9, %9 : vector<16x128xf32>
    %12 = arith.mulf %10, %10 : vector<16x128xf32>
    %13 = arith.addf %11, %12 : vector<16x128xf32>
    %14 = math.sqrt %13 : vector<16x128xf32>
    %cst_6 = arith.constant 1.000000e-07 : f32
    %15 = vector.broadcast %cst_6 : f32 to vector<16x128xf32>
    %16 = arith.addf %14, %15 : vector<16x128xf32>
    %17 = vector.extract_strided_slice %16 {offsets = [0, 0], sizes = [8, 128], strides = [1, 1]} : vector<16x128xf32> to vector<8x128xf32>
    %18 = vector.extract_strided_slice %16 {offsets = [8, 0], sizes = [8, 128], strides = [1, 1]} : vector<16x128xf32> to vector<8x128xf32>
    %19 = arith.subf %17, %18 : vector<8x128xf32>
    %20 = arith.addf %17, %18 : vector<8x128xf32>
    %c8_i32 = arith.constant 8 : i32
    %21 = arith.muli %arg1, %c8_i32 : i32
    %22 = tpu.iota {dimensions = array<i32: 0>} : vector<8x128xi32>
    %23 = vector.broadcast %21 : i32 to vector<8x128xi32>
    %24 = arith.addi %23, %22 : vector<8x128xi32>
    %c128_i32 = arith.constant 128 : i32
    %25 = arith.muli %arg2, %c128_i32 : i32
    %26 = tpu.iota {dimensions = array<i32: 1>} : vector<8x128xi32>
    %27 = vector.broadcast %25 : i32 to vector<8x128xi32>
    %28 = arith.addi %27, %26 : vector<8x128xi32>
    %c7_i32 = arith.constant 7 : i32
    %29 = vector.broadcast %c7_i32 : i32 to vector<8x128xi32>
    %30 = arith.cmpi slt, %24, %29 : vector<8x128xi32>
    %c9_i32 = arith.constant 9 : i32
    %31 = vector.broadcast %c9_i32 : i32 to vector<8x128xi32>
    %32 = arith.cmpi slt, %28, %31 : vector<8x128xi32>
    %33 = arith.andi %30, %32 : vector<8x128xi1>
    %34 = arith.extui %33 : vector<8x128xi1> to vector<8x128xi32>
    %35 = arith.sitofp %34 : vector<8x128xi32> to vector<8x128xf32>
    %c0_7 = arith.constant 0 : index
    %c0_8 = arith.constant 0 : index
    %36 = vector.load %arg6[%c0_7, %c0_8] : memref<1x1xf32, #tpu.memory_space<vmem>>, vector<1x1xf32>
    %37 = arith.mulf %19, %19 : vector<8x128xf32>
    %38 = vector.shape_cast %37 : vector<8x128xf32> to vector<1x8x128xf32>
    %cst_9 = arith.constant dense<0.000000e+00> : vector<1xf32>
    %39 = vector.multi_reduction <add>, %38, %cst_9 [1, 2] : vector<1x8x128xf32> to vector<1xf32>
    %40 = vector.shape_cast %39 : vector<1xf32> to vector<1x1x1xf32>
    %41 = vector.extract %40[0, 0, 0] : f32 from vector<1x1x1xf32>
    %42 = vector.broadcast %41 : f32 to vector<1x1xf32>
    %43 = arith.addf %36, %42 : vector<1x1xf32>
    %c0_10 = arith.constant 0 : index
    %c0_11 = arith.constant 0 : index
    %44 = vector.load %arg6[%c0_10, %c0_11] : memref<1x1xf32, #tpu.memory_space<vmem>>, vector<1x1xf32>
    tpu.vector_store %arg6[%c0_10, %c0_11], %43 {strides = array<i32>} : memref<1x1xf32, #tpu.memory_space<vmem>>, vector<1x1xf32>,
    %c0_12 = arith.constant 0 : index
    %c0_13 = arith.constant 0 : index
    %45 = vector.load %arg7[%c0_12, %c0_13] : memref<1x1xf32, #tpu.memory_space<vmem>>, vector<1x1xf32>
    %46 = arith.mulf %20, %20 : vector<8x128xf32>
    %47 = arith.mulf %46, %35 : vector<8x128xf32>
    %48 = vector.shape_cast %47 : vector<8x128xf32> to vector<1x8x128xf32>
    %cst_14 = arith.constant dense<0.000000e+00> : vector<1xf32>
    %49 = vector.multi_reduction <add>, %48, %cst_14 [1, 2] : vector<1x8x128xf32> to vector<1xf32>
    %50 = vector.shape_cast %49 : vector<1xf32> to vector<1x1x1xf32>
    %51 = vector.extract %50[0, 0, 0] : f32 from vector<1x1x1xf32>
    %52 = vector.broadcast %51 : f32 to vector<1x1xf32>
    %53 = arith.addf %45, %52 : vector<1x1xf32>
    %c0_15 = arith.constant 0 : index
    %c0_16 = arith.constant 0 : index
    %54 = vector.load %arg7[%c0_15, %c0_16] : memref<1x1xf32, #tpu.memory_space<vmem>>, vector<1x1xf32>
    tpu.vector_store %arg7[%c0_15, %c0_16], %53 {strides = array<i32>} : memref<1x1xf32, #tpu.memory_space<vmem>>, vector<1x1xf32>,
    %c0_17 = arith.constant 0 : index
    %c0_18 = arith.constant 0 : index
    %55 = vector.load %arg8[%c0_17, %c0_18] : memref<1x1xf32, #tpu.memory_space<vmem>>, vector<1x1xf32>
    %56 = math.log %17 : vector<8x128xf32>
    %57 = math.log %18 : vector<8x128xf32>
    %58 = arith.subf %56, %57 : vector<8x128xf32>
    %59 = math.absf %58 : vector<8x128xf32>
    %60 = vector.shape_cast %59 : vector<8x128xf32> to vector<1x8x128xf32>
    %cst_19 = arith.constant dense<0.000000e+00> : vector<1xf32>
    %61 = vector.multi_reduction <add>, %60, %cst_19 [1, 2] : vector<1x8x128xf32> to vector<1xf32>
    %62 = vector.shape_cast %61 : vector<1xf32> to vector<1x1x1xf32>
    %63 = vector.extract %62[0, 0, 0] : f32 from vector<1x1x1xf32>
    %64 = vector.broadcast %63 : f32 to vector<1x1xf32>
    %65 = arith.addf %55, %64 : vector<1x1xf32>
    %c0_20 = arith.constant 0 : index
    %c0_21 = arith.constant 0 : index
    %66 = vector.load %arg8[%c0_20, %c0_21] : memref<1x1xf32, #tpu.memory_space<vmem>>, vector<1x1xf32>
    tpu.vector_store %arg8[%c0_20, %c0_21], %65 {strides = array<i32>} : memref<1x1xf32, #tpu.memory_space<vmem>>, vector<1x1xf32>,
    %c0_i32_22 = arith.constant 0 : i32
    %67 = arith.cmpi eq, %arg1, %c0_i32_22 : i32
    %c0_i32_23 = arith.constant 0 : i32
    %68 = arith.cmpi eq, %arg2, %c0_i32_23 : i32
    %69 = arith.andi %67, %68 : i1
    %70 = arith.extui %69 : i1 to i32
    %c0_i32_24 = arith.constant 0 : i32
    %71 = arith.cmpi ne, %70, %c0_i32_24 : i32
    scf.if %71 {
      %c0_25 = arith.constant 0 : index
      %c0_26 = arith.constant 0 : index
      %72 = vector.load %arg6[%c0_25, %c0_26] : memref<1x1xf32, #tpu.memory_space<vmem>>, vector<1x1xf32>
      %73 = math.sqrt %72 : vector<1x1xf32>
      %c0_27 = arith.constant 0 : index
      %c0_28 = arith.constant 0 : index
      %74 = vector.load %arg7[%c0_27, %c0_28] : memref<1x1xf32, #tpu.memory_space<vmem>>, vector<1x1xf32>
      %75 = math.rsqrt %74 : vector<1x1xf32>
      %76 = arith.mulf %73, %75 : vector<1x1xf32>
      %77 = vector.shape_cast %76 : vector<1x1xf32> to vector<1x1xf32>
      %78 = vector.broadcast %77 : vector<1x1xf32> to vector<2x128xf32>
      %c0_29 = arith.constant 0 : index
      %c0_30 = arith.constant 0 : index
      %79 = vector.load %arg8[%c0_29, %c0_30] : memref<1x1xf32, #tpu.memory_space<vmem>>, vector<1x1xf32>
      %80 = vector.shape_cast %79 : vector<1x1xf32> to vector<1x1xf32>
      %81 = vector.broadcast %80 : vector<1x1xf32> to vector<2x128xf32>
      %82 = tpu.iota {dimensions = array<i32: 0>} : vector<2x128xi32>
      %c0_i32_31 = arith.constant 0 : i32
      %83 = vector.broadcast %c0_i32_31 : i32 to vector<2x128xi32>
      %84 = arith.cmpi eq, %82, %83 : vector<2x128xi32>
      %85 = arith.select %84, %78, %81 : vector<2x128xi1>, vector<2x128xf32>
      %86 = vector.shape_cast %85 : vector<2x128xf32> to vector<1x2x128xf32>
      %c0_32 = arith.constant 0 : index
      %c0_33 = arith.constant 0 : index
      %c0_34 = arith.constant 0 : index
      %87 = vector.load %arg5[%c0_32, %c0_33, %c0_34] : memref<1x2x128xf32, #tpu.memory_space<vmem>>, vector<1x2x128xf32>
      tpu.vector_store %arg5[%c0_32, %c0_33, %c0_34], %86 {strides = array<i32>} : memref<1x2x128xf32, #tpu.memory_space<vmem>>, vector<1x2x128xf32>,
    } else {
    }
    return
  }
  func.func @transform_0(%arg0: i32, %arg1: i32, %arg2: i32) -> (i32, i32, i32) {
    %c0_i32 = arith.constant 0 : i32
    %c0_i32_0 = arith.constant 0 : i32
    return %arg0, %arg1, %c0_i32 : i32, i32, i32
  }
  func.func @transform_1(%arg0: i32, %arg1: i32, %arg2: i32) -> (i32, i32) {
    %c0_i32 = arith.constant 0 : i32
    %c0_i32_0 = arith.constant 0 : i32
    return %c0_i32, %arg2 : i32, i32
  }
  func.func @transform_2(%arg0: i32, %arg1: i32, %arg2: i32) -> (i32, i32, i32) {
    %c0_i32 = arith.constant 0 : i32
    %c0_i32_0 = arith.constant 0 : i32
    %c0_i32_1 = arith.constant 0 : i32
    return %arg0, %c0_i32, %c0_i32_0 : i32, i32, i32
  }
}

</mosaic_0001>

<llo_original>
// kernel: _forward_impl.5
$region0: #{_forward_impl.5}
  #allocation0 [shape = 'u32[]', space=smem, size = 0x4, offset = 0x4, fixed_abs, tag = 'smem constant byte address 0x4 - core index']
  #allocation1 [shape = 'u32[144,128]{1,0:T(1,128)}', space=vmem, size = 0x12000, scoped, tag = 'internal scratch']
  %s0 = inlined_call_operand.vmem [shape: f32[2,16,8], index: 0, kind: input, shape index: {}]
  %s1 = inlined_call_operand.vmem [shape: f32[2,16,8], index: 1, kind: input, shape index: {}]
  %s2 = inlined_call_operand.vmem [shape: f32[2,16,1], index: 2, kind: input, shape index: {}]
  %s3 = inlined_call_operand.vmem [shape: f32[2,1,192], index: 3, kind: input, shape index: {}]
  %s4 = inlined_call_operand.vmem [shape: f32[2,1,192], index: 4, kind: input, shape index: {}]
  %s5 = inlined_call_operand.vmem [shape: f32[2,4,128], index: 5, kind: output, shape index: {}]
  %s6 = sld [smem:[#allocation0]]
  $region53: #{_forward_impl.5} parent=0
    _
  %s8 = ssub.s32 1, %s6
  %s9 = scalar_select 0, %s8, %s6
  loop: start=0, step=1, limit=4
  $region2: #{_forward_impl.5} parent=0 // loop_pre_header
    _
  $region3: #{_forward_impl.5} parent=0 // loop_header
    %s11 = sphi 0, %s15
    %p12 = scmp.ge.s32.totalorder %s11, 4
    %s21 = sphi 0, %s23
    %s24 = sphi 0, %s21
    %s25 = sphi 0, %s24
    %s41 = sphi 0, %s25
    %s47 = sphi 0, %s49
    %s50 = sphi 0, %s47
    %s51 = sphi 0, %s50
    %s67 = sphi 0, %s51
    %s73 = sphi 0, %s75
    %s76 = sphi 0, %s73
    %s77 = sphi 0, %s76
    %s93 = sphi 0, %s77
    %s99 = sphi 0, %s101
    %s102 = sphi 0, %s99
    %s103 = sphi 0, %s102
    %s119 = sphi 0, %s103
    %s125 = sphi 0, %s127
    %s128 = sphi 0, %s125
    %s129 = sphi 0, %s128
    %s145 = sphi 0, %s129
    %s151 = sphi 0, %s153
    %s154 = sphi 0, %s151
    %s155 = sphi 0, %s154
    %s171 = sphi 0, %s155
  $region4: #{_forward_impl.5} parent=0 // loop_header_branch
    %14 = sbr.rel (%p12) target = $region8
  $region5: #{_forward_impl.5} parent=0 // loop_body
    %s16 = ssub.s32 %s11, 1
    %s17 = ssub.s32 %s11, 2
    %s18 = sadd.s32 %s11, 1
    %s19 = ssub.s32 %s11, %s18
    %p20 = scmp.eq.s32.totalorder %s19, 0
    %s22 = sadd.s32 %s21, 1
    %s23 = scalar_select %p20, %s21, %s22
    %p26 = pneg %p20
    %p27 = scmp.eq.s32.totalorder %s11, 1
    %p28 = por %p26, %p27
    %p29 = scmp.ne.s32.totalorder %s21, %s24
    %p30 = scmp.eq.s32.totalorder %s11, 0
    %p31 = por %p29, %p30
    %p32 = scmp.ne.s32.totalorder %s21, %s24
    %p33 = scmp.eq.s32.totalorder %s16, 1
    %p34 = por %p32, %p33
    %p35 = scmp.ne.s32.totalorder %s24, %s25
    %p36 = scmp.eq.s32.totalorder %s16, 0
    %p37 = por %p35, %p36
    %p38 = scmp.ne.s32.totalorder %s24, %s25
    %p39 = scmp.eq.s32.totalorder %s17, 1
    %p40 = por %p38, %p39
    %p42 = scmp.ne.s32.totalorder %s25, %s41
    %p43 = scmp.eq.s32.totalorder %s17, 0
    %p44 = por %p42, %p43
    %s45 = ssub.s32 %s11, %s18
    %p46 = scmp.eq.s32.totalorder %s45, 0
    %s48 = sadd.s32 %s47, 1
    %s49 = scalar_select %p46, %s47, %s48
    %p52 = pneg %p46
    %p53 = scmp.eq.s32.totalorder %s11, 1
    %p54 = por %p52, %p53
    %p55 = scmp.ne.s32.totalorder %s47, %s50
    %p56 = scmp.eq.s32.totalorder %s11, 0
    %p57 = por %p55, %p56
    %p58 = scmp.ne.s32.totalorder %s47, %s50
    %p59 = scmp.eq.s32.totalorder %s16, 1
    %p60 = por %p58, %p59
    %p61 = scmp.ne.s32.totalorder %s50, %s51
    %p62 = scmp.eq.s32.totalorder %s16, 0
    %p63 = por %p61, %p62
    %p64 = scmp.ne.s32.totalorder %s50, %s51
    %p65 = scmp.eq.s32.totalorder %s17, 1
    %p66 = por %p64, %p65
    %p68 = scmp.ne.s32.totalorder %s51, %s67
    %p69 = scmp.eq.s32.totalorder %s17, 0
    %p70 = por %p68, %p69
    %s71 = ssub.s32 %s11, %s18
    %p72 = scmp.eq.s32.totalorder %s71, 0
    %s74 = sadd.s32 %s73, 1
    %s75 = scalar_select %p72, %s73, %s74
    %p78 = pneg %p72
    %p79 = scmp.eq.s32.totalorder %s11, 1
    %p80 = por %p78, %p79
    %p81 = scmp.ne.s32.totalorder %s73, %s76
    %p82 = scmp.eq.s32.totalorder %s11, 0
    %p83 = por %p81, %p82
    %p84 = scmp.ne.s32.totalorder %s73, %s76
    %p85 = scmp.eq.s32.totalorder %s16, 1
    %p86 = por %p84, %p85
    %p87 = scmp.ne.s32.totalorder %s76, %s77
    %p88 = scmp.eq.s32.totalorder %s16, 0
    %p89 = por %p87, %p88
    %p90 = scmp.ne.s32.totalorder %s76, %s77
    %p91 = scmp.eq.s32.totalorder %s17, 1
    %p92 = por %p90, %p91
    %p94 = scmp.ne.s32.totalorder %s77, %s93
    %p95 = scmp.eq.s32.totalorder %s17, 0
    %p96 = por %p94, %p95
    %s97 = ssub.s32 %s11, %s18
    %p98 = scmp.eq.s32.totalorder %s97, 0
    %s100 = sadd.s32 %s99, 1
    %s101 = scalar_select %p98, %s99, %s100
    %p104 = pneg %p98
    %p105 = scmp.eq.s32.totalorder %s11, 1
    %p106 = por %p104, %p105
    %p107 = scmp.ne.s32.totalorder %s99, %s102
    %p108 = scmp.eq.s32.totalorder %s11, 0
    %p109 = por %p107, %p108
    %p110 = scmp.ne.s32.totalorder %s99, %s102
    %p111 = scmp.eq.s32.totalorder %s16, 1
    %p112 = por %p110, %p111
    %p113 = scmp.ne.s32.totalorder %s102, %s103
    %p114 = scmp.eq.s32.totalorder %s16, 0
    %p115 = por %p113, %p114
    %p116 = scmp.ne.s32.totalorder %s102, %s103
    %p117 = scmp.eq.s32.totalorder %s17, 1
    %p118 = por %p116, %p117
    %p120 = scmp.ne.s32.totalorder %s103, %s119
    %p121 = scmp.eq.s32.totalorder %s17, 0
    %p122 = por %p120, %p121
    %s123 = ssub.s32 %s11, %s18
    %p124 = scmp.eq.s32.totalorder %s123, 0
    %s126 = sadd.s32 %s125, 1
    %s127 = scalar_select %p124, %s125, %s126
    %p130 = pneg %p124
    %p131 = scmp.eq.s32.totalorder %s11, 1
    %p132 = por %p130, %p131
    %p133 = scmp.ne.s32.totalorder %s125, %s128
    %p134 = scmp.eq.s32.totalorder %s11, 0
    %p135 = por %p133, %p134
    %p136 = scmp.ne.s32.totalorder %s125, %s128
    %p137 = scmp.eq.s32.totalorder %s16, 1
    %p138 = por %p136, %p137
    %p139 = scmp.ne.s32.totalorder %s128, %s129
    %p140 = scmp.eq.s32.totalorder %s16, 0
    %p141 = por %p139, %p140
    %p142 = scmp.ne.s32.totalorder %s128, %s129
    %p143 = scmp.eq.s32.totalorder %s17, 1
    %p144 = por %p142, %p143
    %p146 = scmp.ne.s32.totalorder %s129, %s145
    %p147 = scmp.eq.s32.totalorder %s17, 0
    %p148 = por %p146, %p147
    %s149 = ssub.s32 %s11, %s18
    %p150 = scmp.eq.s32.totalorder %s149, 0
    %s152 = sadd.s32 %s151, 1
    %s153 = scalar_select %p150, %s151, %s152
    %p156 = pneg %p150
    %p157 = scmp.eq.s32.totalorder %s11, 1
    %p158 = por %p156, %p157
    %p159 = scmp.ne.s32.totalorder %s151, %s154
    %p160 = scmp.eq.s32.totalorder %s11, 0
    %p161 = por %p159, %p160
    %p162 = scmp.ne.s32.totalorder %s151, %s154
    %p163 = scmp.eq.s32.totalorder %s16, 1
    %p164 = por %p162, %p163
    %p165 = scmp.ne.s32.totalorder %s154, %s155
    %p166 = scmp.eq.s32.totalorder %s16, 0
    %p167 = por %p165, %p166
    %p168 = scmp.ne.s32.totalorder %s154, %s155
    %p169 = scmp.eq.s32.totalorder %s17, 1
    %p170 = por %p168, %p169
    %p172 = scmp.ne.s32.totalorder %s155, %s171
    %p173 = scmp.eq.s32.totalorder %s17, 0
    %p174 = por %p172, %p173
    %p175 = scmp.le.s32.totalorder 1, %s11
    %p176 = scmp.lt.s32.totalorder %s11, 3
    %p177 = pnand %p175, %p176
    %p178 = pneg %p177
    // Predicated region
    $region9: #{_forward_impl.5} parent=5 // pred_check
      _
    $region10: #{_forward_impl.5} parent=5 // pred_check_branch
      %180 = sbr.rel (%p177) target = $region12
    $region11: #{_forward_impl.5} parent=5 // pred_region
      %s181 = ssub.s32 %s11, 1
    $region12: #{_forward_impl.5} parent=5 // pred_fallthru
      _
    %p182 = scmp.lt.s32.totalorder %s11, 2
    // Predicated region
    $region13: #{_forward_impl.5} parent=5 // pred_check
      %p183 = pneg %p182
    $region14: #{_forward_impl.5} parent=5 // pred_check_branch
      %185 = sbr.rel (%p183) target = $region16
    $region15: #{_forward_impl.5} parent=5 // pred_region
      // Predicated region
      $region17: #{_forward_impl.5} parent=15 // pred_check
        %p186 = pneg %p31
      $region18: #{_forward_impl.5} parent=15 // pred_check_branch
        %188 = sbr.rel (%p186) target = $region20
      $region19: #{_forward_impl.5} parent=15 // pred_region
        %p189 = scmp.lt.s32.totalorder %s11, 1
        %s190 = scalar_select %p189, %s11, 1
        %s191 = smul.addr %s190, 2
        %s192 = smul.addr %s191, 8
        %s193 = scalar_lea.vmem %s0, %s192
      $region20: #{_forward_impl.5} parent=15 // pred_fallthru
        _
      // Predicated region
      $region21: #{_forward_impl.5} parent=15 // pred_check
        %p194 = pneg %p57
      $region22: #{_forward_impl.5} parent=15 // pred_check_branch
        %196 = sbr.rel (%p194) target = $region24
      $region23: #{_forward_impl.5} parent=15 // pred_region
        %p197 = scmp.lt.s32.totalorder %s11, 1
        %s198 = scalar_select %p197, %s11, 1
        %s199 = smul.addr %s198, 2
        %s200 = smul.addr %s199, 8
        %s201 = scalar_lea.vmem %s1, %s200
      $region24: #{_forward_impl.5} parent=15 // pred_fallthru
        _
      // Predicated region
      $region25: #{_forward_impl.5} parent=15 // pred_check
        %p202 = pneg %p83
      $region26: #{_forward_impl.5} parent=15 // pred_check_branch
        %204 = sbr.rel (%p202) target = $region28
      $region27: #{_forward_impl.5} parent=15 // pred_region
        %p205 = scmp.lt.s32.totalorder %s11, 1
        %s206 = scalar_select %p205, %s11, 1
        %s207 = smul.addr %s206, 2
        %s208 = smul.addr %s207, 8
        %s209 = scalar_lea.vmem %s2, %s208
      $region28: #{_forward_impl.5} parent=15 // pred_fallthru
        _
      // Predicated region
      $region29: #{_forward_impl.5} parent=15 // pred_check
        %p210 = pneg %p109
      $region30: #{_forward_impl.5} parent=15 // pred_check_branch
        %212 = sbr.rel (%p210) target = $region32
      $region31: #{_forward_impl.5} parent=15 // pred_region
        %p213 = scmp.lt.s32.totalorder %s11, 1
        %s214 = scalar_select %p213, %s11, 1
        %s215 = smul.addr %s214, 2
        %s216 = scalar_lea.vmem %s3, %s215
      $region32: #{_forward_impl.5} parent=15 // pred_fallthru
        _
      // Predicated region
      $region33: #{_forward_impl.5} parent=15 // pred_check
        %p217 = pneg %p135
      $region34: #{_forward_impl.5} parent=15 // pred_check_branch
        %219 = sbr.rel (%p217) target = $region36
      $region35: #{_forward_impl.5} parent=15 // pred_region
        %p220 = scmp.lt.s32.totalorder %s11, 1
        %s221 = scalar_select %p220, %s11, 1
        %s222 = smul.addr %s221, 2
        %s223 = scalar_lea.vmem %s4, %s222
      $region36: #{_forward_impl.5} parent=15 // pred_fallthru
        _
    $region16: #{_forward_impl.5} parent=5 // pred_fallthru
      _
    %p224 = scmp.le.s32.totalorder 1, %s11
    %p225 = scmp.lt.s32.totalorder %s11, 3
    %p226 = pnand %p224, %p225
    %p227 = pneg %p226
    // Predicated region
    $region37: #{_forward_impl.5} parent=5 // pred_check
      _
    $region38: #{_forward_impl.5} parent=5 // pred_check_branch
      %229 = sbr.rel (%p226) target = $region40
    $region39: #{_forward_impl.5} parent=5 // pred_region
      %s230 = ssub.s32 %s11, 1
      %p231 = scmp.lt.s32.totalorder %s16, 1
      %s232 = scalar_select %p231, %s16, 1
      %s233 = smul.addr %s232, 2
      %s234 = smul.addr %s233, 8
      %s235 = scalar_lea.vmem %s0, %s234
      %p236 = pneg %p37
      %p237 = pneg %p34
      %p238 = scmp.lt.s32.totalorder %s16, 1
      %s239 = scalar_select %p238, %s16, 1
      %s240 = smul.addr %s239, 2
      %s241 = smul.addr %s240, 8
      %s242 = scalar_lea.vmem %s1, %s241
      %p243 = pneg %p63
      %p244 = pneg %p60
      %p245 = scmp.lt.s32.totalorder %s16, 1
      %s246 = scalar_select %p245, %s16, 1
      %s247 = smul.addr %s246, 2
      %s248 = smul.addr %s247, 8
      %s249 = scalar_lea.vmem %s2, %s248
      %p250 = pneg %p89
      %p251 = pneg %p86
      %p252 = scmp.lt.s32.totalorder %s16, 1
      %s253 = scalar_select %p252, %s16, 1
      %s254 = smul.addr %s253, 2
      %s255 = scalar_lea.vmem %s3, %s254
      %p256 = pneg %p115
      %p257 = pneg %p112
      %p258 = scmp.lt.s32.totalorder %s16, 1
      %s259 = scalar_select %p258, %s16, 1
      %s260 = smul.addr %s259, 2
      %s261 = scalar_lea.vmem %s4, %s260
      %p262 = pneg %p141
      %p263 = pneg %p138
      %p264 = pneg %p167
      %p265 = pneg %p164
      %p266 = scmp.lt.s32.totalorder %s16, 1
      %s267 = scalar_select %p266, %s16, 1
      %s268 = smul.addr %s267, 4
      %s269 = scalar_lea.vmem %s5, %s268
      %p270 = scmp.lt.s32.totalorder %s16, 1
      %s271 = scalar_select %p270, %s16, 1
      %s272 = smul.addr %s271, 2
      %s273 = smul.addr %s272, 8
      %s274 = scalar_lea.vmem %s0, %s273
      %p275 = scmp.lt.s32.totalorder %s16, 1
      %s276 = scalar_select %p275, %s16, 1
      %s277 = smul.addr %s276, 2
      %s278 = smul.addr %s277, 8
      %s279 = scalar_lea.vmem %s1, %s278
      %p280 = scmp.lt.s32.totalorder %s16, 1
      %s281 = scalar_select %p280, %s16, 1
      %s282 = smul.addr %s281, 2
      %s283 = smul.addr %s282, 8
      %s284 = scalar_lea.vmem %s2, %s283
      %p285 = scmp.lt.s32.totalorder %s16, 1
      %s286 = scalar_select %p285, %s16, 1
      %s287 = smul.addr %s286, 2
      %s288 = scalar_lea.vmem %s3, %s287
      %p289 = scmp.lt.s32.totalorder %s16, 1
      %s290 = scalar_select %p289, %s16, 1
      %s291 = smul.addr %s290, 2
      %s292 = scalar_lea.vmem %s4, %s291
      %p293 = scmp.lt.s32.totalorder %s16, 1
      %s294 = scalar_select %p293, %s16, 1
      %s295 = smul.addr %s294, 4
      %s296 = scalar_lea.vmem %s5, %s295
      %v297 = vld [vmem:[%s274] sm:$0xff]
      %v298 = vld [vmem:[%s274 + $0x8] sm:$0xff]
      %v299 = vld [vmem:[%s279] sm:$0xff]
      %v300 = vld [vmem:[%s279 + $0x8] sm:$0xff]
      %v301 = vld [vmem:[%s284] sm:$0xff]
      %v302 = vld [vmem:[%s284 + $0x8] sm:$0xff]
      %v303 = vmul.f32 %v301, %v301
      %v304 = vmul.f32 %v302, %v302
      %v305 = vmul.f32 %v299, %v299
      %v306 = vmul.f32 %v300, %v300
      %308 = vset.pattern.permute.xlu0 0
      %309 = vperm.xlu0 %308, %v303
      %v310 = vpop.permute.xlu0 %309
      %313 = vset.pattern.permute.xlu0 0
      %314 = vperm.xlu0 %313, %v304
      %v315 = vpop.permute.xlu0 %314
      %v317 = vmul.f32 %v305, %v310
      %v318 = vmul.f32 %v306, %v315
      %vm319 = vcmask 64512
      %v320 = vsel %vm319, %v317, 0.0
      %v321 = vsel %vm319, %v318, 0.0
      %v322 = vadd.f32 %v320, %v321
      %323 = vadd.xlane.f32.xlu0 %v322
      %v324 = vpop.xlane.xlu0 %323
      %v325 = vrot.slane %v324, 4
      %v326 = vadd.f32 %v324, %v325
      %v327 = vrot.slane %v326, 2
      %v328 = vadd.f32 %v326, %v327
      %v329 = vrot.slane %v328, 1
      %v330 = vadd.f32 %v328, %v329
      %s331 = vtos %v330
      %v332 = vstv %s331
      %v333 = vmul.f32 %v297, %v297
      %v334 = vmul.f32 %v298, %v298
      %v335 = vmul.f32 %v333, %v310
      %v336 = vmul.f32 %v334, %v315
      %v337 = vsel %vm319, %v335, 0.0
      %v338 = vsel %vm319, %v336, 0.0
      %v339 = vadd.f32 %v337, %v338
      %340 = vadd.xlane.f32.xlu0 %v339
      %v341 = vpop.xlane.xlu0 %340
      %v342 = vrot.slane %v341, 4
      %v343 = vadd.f32 %v341, %v342
      %v344 = vrot.slane %v343, 2
      %v345 = vadd.f32 %v343, %v344
      %v346 = vrot.slane %v345, 1
      %v347 = vadd.f32 %v345, %v346
      %s348 = vtos %v347
      %v349 = vstv %s348
      %v350 = vld [vmem:[%s288] sm:$0x3]
      %v351 = vadd.f32 %v350, 1e-05
      %v352 = vld [vmem:[%s292] sm:$0x3]
      %v353 = vadd.f32 %v352, 1e-05
      %v354 = vsub.f32 %v353, %v351
      %v355 = vadd.f32 %v353, %v351
      %v356 = vmul.f32 %v354, %v354
      %v358 = vlaneseq
      %v359 = vshrl.u32 %v358, 7
      %v360 = vsub.s32 0, %v359
      %v361 = vrot.slane %v356, %v360
      %v362 = vlaneseq
      %v363 = vshrl.u32 %v362, 7
      %v364 = vsub.s32 1, %v363
      %v365 = vrot.slane %v356, %v364
      %vm368 = vcmask 1040384
      %v369 = vsel %vm368, %v361, 0.0
      %vm370 = vcmask 516096
      %v371 = vsel %vm370, %v365, 0.0
      %v372 = vadd.f32 %v369, %v371
      %373 = vadd.xlane.f32.xlu0 %v372
      %v374 = vpop.xlane.xlu0 %373
      %v375 = vrot.slane %v374, 4
      %v376 = vadd.f32 %v374, %v375
      %v377 = vrot.slane %v376, 2
      %v378 = vadd.f32 %v376, %v377
      %v379 = vrot.slane %v378, 1
      %v380 = vadd.f32 %v378, %v379
      %s381 = vtos %v380
      %v382 = vstv %s381
      %v383 = vmul.f32 %v355, %v355
      %v385 = vlaneseq
      %v386 = vshrl.u32 %v385, 7
      %v387 = vsub.s32 0, %v386
      %v388 = vrot.slane %v383, %v387
      %v389 = vlaneseq
      %v390 = vshrl.u32 %v389, 7
      %v391 = vsub.s32 1, %v390
      %v392 = vrot.slane %v383, %v391
      %v395 = vsel %vm368, %v388, 0.0
      %v396 = vsel %vm370, %v392, 0.0
      %v397 = vadd.f32 %v395, %v396
      %398 = vadd.xlane.f32.xlu0 %v397
      %v399 = vpop.xlane.xlu0 %398
      %v400 = vrot.slane %v399, 4
      %v401 = vadd.f32 %v399, %v400
      %v402 = vrot.slane %v401, 2
      %v403 = vadd.f32 %v401, %v402
      %v404 = vrot.slane %v403, 1
      %v405 = vadd.f32 %v403, %v404
      %s406 = vtos %v405
      %v407 = vstv %s406
      %v408 = vrsqrt.pop %v382
      %v409 = vmul.f32 %v382, %v408
      %vm410 = vcmp.eq.f32.partialorder %v382, inf
      %v411 = vsel %vm410, %v382, %v409
      %vm412 = vcmp.eq.f32.partialorder %v382, 0.0
      %v413 = vand.u32 %v382, 2147483648
      %v414 = vsel %vm412, %v413, %v411
      %v415 = vrsqrt.pop %v407
      %v416 = vmul.f32 %v414, %v415
      %v417 = vlog2.pop %v351
      %v418 = vmul.f32 %v417, 0.6931472
      %v419 = vlog2.pop %v353
      %v420 = vmul.f32 %v419, 0.6931472
      %v421 = vsub.f32 %v418, %v420
      %v422 = vand.u32 2147483647, %v421
      %v424 = vlaneseq
      %v425 = vshrl.u32 %v424, 7
      %v426 = vsub.s32 0, %v425
      %v427 = vrot.slane %v422, %v426
      %v428 = vlaneseq
      %v429 = vshrl.u32 %v428, 7
      %v430 = vsub.s32 1, %v429
      %v431 = vrot.slane %v422, %v430
      %v434 = vsel %vm368, %v427, 0.0
      %v435 = vsel %vm370, %v431, 0.0
      %v436 = vadd.f32 %v434, %v435
      %437 = vadd.xlane.f32.xlu0 %v436
      %v438 = vpop.xlane.xlu0 %437
      %v439 = vrot.slane %v438, 4
      %v440 = vadd.f32 %v438, %v439
      %v441 = vrot.slane %v440, 2
      %v442 = vadd.f32 %v440, %v441
      %v443 = vrot.slane %v442, 1
      %v444 = vadd.f32 %v442, %v443
      %s445 = vtos %v444
      %v446 = vlaneseq
      %v447 = vshrl.u32 %v446, 7
      %v448 = vrsqrt.pop %v332
      %v449 = vmul.f32 %v332, %v448
      %vm450 = vcmp.eq.f32.partialorder %v332, inf
      %v451 = vsel %vm450, %v332, %v449
      %vm452 = vcmp.eq.f32.partialorder %v332, 0.0
      %v453 = vand.u32 %v332, 2147483648
      %v454 = vsel %vm452, %v453, %v451
      %v455 = vrsqrt.pop %v349
      %v456 = vmul.f32 %v349, %v455
      %vm457 = vcmp.eq.f32.partialorder %v349, inf
      %v458 = vsel %vm457, %v349, %v456
      %vm459 = vcmp.eq.f32.partialorder %v349, 0.0
      %v460 = vand.u32 %v349, 2147483648
      %v461 = vsel %vm459, %v460, %v458
      %v462 = vstv %s445
      %vm463 = vcmp.eq.s32.totalorder %v447, 0
      %vm464 = vcmp.eq.s32.totalorder %v447, 1
      %vm465 = vcmp.eq.s32.totalorder %v447, 2
      %v466 = vsel %vm465, %v416, %v462
      %v467 = vsel %vm464, %v461, %v466
      %v468 = vsel %vm463, %v454, %v467
      %469 = vst [vmem:[%s296] sm:$0xf] %v468
      %p470 = scmp.lt.s32.totalorder %s16, 1
      %s471 = scalar_select %p470, %s16, 1
      %s472 = smul.addr %s471, 4
      %s473 = scalar_lea.vmem %s5, %s472
      // Predicated region
      $region41: #{_forward_impl.5} parent=39 // pred_check
        %p474 = pneg %p164
      $region42: #{_forward_impl.5} parent=39 // pred_check_branch
        %476 = sbr.rel (%p474) target = $region44
      $region43: #{_forward_impl.5} parent=39 // pred_region
        _
      $region44: #{_forward_impl.5} parent=39 // pred_fallthru
        _
    $region40: #{_forward_impl.5} parent=5 // pred_fallthru
      _
    %p477 = scmp.le.s32.totalorder 2, %s11
    // Predicated region
    $region45: #{_forward_impl.5} parent=5 // pred_check
      %p478 = pneg %p477
    $region46: #{_forward_impl.5} parent=5 // pred_check_branch
      %480 = sbr.rel (%p478) target = $region48
    $region47: #{_forward_impl.5} parent=5 // pred_region
      %s481 = ssub.s32 %s11, 2
      // Predicated region
      $region49: #{_forward_impl.5} parent=47 // pred_check
        %p482 = pneg %p170
      $region50: #{_forward_impl.5} parent=47 // pred_check_branch
        %484 = sbr.rel (%p482) target = $region52
      $region51: #{_forward_impl.5} parent=47 // pred_region
        %p485 = scmp.lt.s32.totalorder %s17, 1
        %s486 = scalar_select %p485, %s17, 1
        %s487 = smul.addr %s486, 4
        %s488 = scalar_lea.vmem %s5, %s487
      $region52: #{_forward_impl.5} parent=47 // pred_fallthru
        _
    $region48: #{_forward_impl.5} parent=5 // pred_fallthru
      _
  $region6: #{_forward_impl.5} parent=0 // loop_footer
    %s15 = sadd.s32 1, %s11
  $region7: #{_forward_impl.5} parent=0 // loop_footer_branch
    %10 = sbr.rel target = $region3
  $region8: #{_forward_impl.5} parent=0 // loop_exit
    _

// kernel: _forward_impl.4
$region0: #{_forward_impl.4}
  #allocation0 [shape = 'u32[]', space=smem, size = 0x4, offset = 0x4, fixed_abs, tag = 'smem constant byte address 0x4 - core index']
  #allocation1 [shape = 'u32[144,128]{1,0:T(1,128)}', space=vmem, size = 0x12000, scoped, tag = 'internal scratch']
  #allocation2 [shape = 'f32[1,1]{1,0:T(1,128)}', space=vmem, size = 0x200, scoped, tag = 'scratch operand']
  #allocation3 [shape = 'f32[1,1]{1,0:T(1,128)}', space=vmem, size = 0x200, scoped, tag = 'scratch operand']
  #allocation4 [shape = 'f32[1,1]{1,0:T(1,128)}', space=vmem, size = 0x200, scoped, tag = 'scratch operand']
  %s0 = inlined_call_operand.vmem [shape: f32[2,16,16], index: 0, kind: input, shape index: {}]
  %s1 = inlined_call_operand.vmem [shape: f32[16,256], index: 1, kind: input, shape index: {}]
  %s2 = inlined_call_operand.vmem [shape: f32[2,2,128], index: 2, kind: output, shape index: {}]
  %s3 = sld [smem:[#allocation0]]
  $region49: #{_forward_impl.4} parent=0
    _
  %s5 = ssub.s32 1, %s3
  %s6 = scalar_select 0, %s5, %s3
  loop: start=0, step=1, limit=4
  $region2: #{_forward_impl.4} parent=0 // loop_pre_header
    _
  $region3: #{_forward_impl.4} parent=0 // loop_header
    %s8 = sphi 0, %s12
    %p9 = scmp.ge.s32.totalorder %s8, 4
    %s15 = sphi 0, %s34
    %s16 = sphi 0, %s30
    %s17 = sphi 0, %s26
    %s18 = sphi 0, %s15
    %s19 = sphi 0, %s16
    %s20 = sphi 0, %s17
    %s21 = sphi 0, %s18
    %s22 = sphi 0, %s19
    %s23 = sphi 0, %s20
    %s39 = sphi 0, %s41
    %s42 = sphi 0, %s39
    %s43 = sphi 0, %s42
    %s59 = sphi 0, %s43
    %s65 = sphi 0, %s67
    %s68 = sphi 0, %s65
    %s69 = sphi 0, %s68
    %s85 = sphi 0, %s69
    %s91 = sphi 0, %s93
    %s94 = sphi 0, %s91
    %s95 = sphi 0, %s94
    %s111 = sphi 0, %s95
  $region4: #{_forward_impl.4} parent=0 // loop_header_branch
    %11 = sbr.rel (%p9) target = $region8
  $region5: #{_forward_impl.4} parent=0 // loop_body
    %s13 = ssub.s32 %s8, 1
    %s14 = ssub.s32 %s8, 2
    %s24 = sadd.s32 1, %s17
    %p25 = scmp.ge.s32.totalorder %s24, 1
    %s26 = scalar_select %p25, 0, %s24
    %s27 = sadd.s32 1, %s16
    %s28 = scalar_select %p25, %s27, %s16
    %p29 = scmp.ge.s32.totalorder %s28, 1
    %s30 = scalar_select %p29, 0, %s28
    %s31 = sadd.s32 1, %s15
    %s32 = scalar_select %p29, %s31, %s15
    %p33 = scmp.ge.s32.totalorder %s32, 2
    %s34 = scalar_select %p33, 0, %s32
    %s35 = ssub.s32 %s15, %s34
    %s36 = ssub.s32 %s16, %s30
    %s37 = sor.u32 %s35, %s36
    %p38 = scmp.eq.s32.totalorder %s37, 0
    %s40 = sadd.s32 %s39, 1
    %s41 = scalar_select %p38, %s39, %s40
    %p44 = pneg %p38
    %p45 = scmp.eq.s32.totalorder %s8, 1
    %p46 = por %p44, %p45
    %p47 = scmp.ne.s32.totalorder %s39, %s42
    %p48 = scmp.eq.s32.totalorder %s8, 0
    %p49 = por %p47, %p48
    %p50 = scmp.ne.s32.totalorder %s39, %s42
    %p51 = scmp.eq.s32.totalorder %s13, 1
    %p52 = por %p50, %p51
    %p53 = scmp.ne.s32.totalorder %s42, %s43
    %p54 = scmp.eq.s32.totalorder %s13, 0
    %p55 = por %p53, %p54
    %p56 = scmp.ne.s32.totalorder %s42, %s43
    %p57 = scmp.eq.s32.totalorder %s14, 1
    %p58 = por %p56, %p57
    %p60 = scmp.ne.s32.totalorder %s43, %s59
    %p61 = scmp.eq.s32.totalorder %s14, 0
    %p62 = por %p60, %p61
    %s63 = ssub.s32 %s17, %s26
    %p64 = scmp.eq.s32.totalorder %s63, 0
    %s66 = sadd.s32 %s65, 1
    %s67 = scalar_select %p64, %s65, %s66
    %p70 = pneg %p64
    %p71 = scmp.eq.s32.totalorder %s8, 1
    %p72 = por %p70, %p71
    %p73 = scmp.ne.s32.totalorder %s65, %s68
    %p74 = scmp.eq.s32.totalorder %s8, 0
    %p75 = por %p73, %p74
    %p76 = scmp.ne.s32.totalorder %s65, %s68
    %p77 = scmp.eq.s32.totalorder %s13, 1
    %p78 = por %p76, %p77
    %p79 = scmp.ne.s32.totalorder %s68, %s69
    %p80 = scmp.eq.s32.totalorder %s13, 0
    %p81 = por %p79, %p80
    %p82 = scmp.ne.s32.totalorder %s68, %s69
    %p83 = scmp.eq.s32.totalorder %s14, 1
    %p84 = por %p82, %p83
    %p86 = scmp.ne.s32.totalorder %s69, %s85
    %p87 = scmp.eq.s32.totalorder %s14, 0
    %p88 = por %p86, %p87
    %s89 = ssub.s32 %s15, %s34
    %p90 = scmp.eq.s32.totalorder %s89, 0
    %s92 = sadd.s32 %s91, 1
    %s93 = scalar_select %p90, %s91, %s92
    %p96 = pneg %p90
    %p97 = scmp.eq.s32.totalorder %s8, 1
    %p98 = por %p96, %p97
    %p99 = scmp.ne.s32.totalorder %s91, %s94
    %p100 = scmp.eq.s32.totalorder %s8, 0
    %p101 = por %p99, %p100
    %p102 = scmp.ne.s32.totalorder %s91, %s94
    %p103 = scmp.eq.s32.totalorder %s13, 1
    %p104 = por %p102, %p103
    %p105 = scmp.ne.s32.totalorder %s94, %s95
    %p106 = scmp.eq.s32.totalorder %s13, 0
    %p107 = por %p105, %p106
    %p108 = scmp.ne.s32.totalorder %s94, %s95
    %p109 = scmp.eq.s32.totalorder %s14, 1
    %p110 = por %p108, %p109
    %p112 = scmp.ne.s32.totalorder %s95, %s111
    %p113 = scmp.eq.s32.totalorder %s14, 0
    %p114 = por %p112, %p113
    %p115 = scmp.le.s32.totalorder 1, %s8
    %p116 = scmp.lt.s32.totalorder %s8, 3
    %p117 = pnand %p115, %p116
    %p118 = pneg %p117
    // Predicated region
    $region9: #{_forward_impl.4} parent=5 // pred_check
      _
    $region10: #{_forward_impl.4} parent=5 // pred_check_branch
      %120 = sbr.rel (%p117) target = $region12
    $region11: #{_forward_impl.4} parent=5 // pred_region
      %s121 = ssub.s32 %s8, 1
      // Predicated region
      $region13: #{_forward_impl.4} parent=11 // pred_check
        %p122 = pneg %p81
      $region14: #{_forward_impl.4} parent=11 // pred_check_branch
        %124 = sbr.rel (%p122) target = $region16
      $region15: #{_forward_impl.4} parent=11 // pred_region
        %s125 = smul.u32 2, %s20
        %p126 = scmp.lt.s32.totalorder %s125, 1
        %s127 = scalar_select %p126, %s125, 1
        %s128 = smul.addr %s127, 8
        %s129 = scalar_lea.vmem %s1, %s128
        %s130 = smul.u32 2, %s20
      $region16: #{_forward_impl.4} parent=11 // pred_fallthru
        _
    $region12: #{_forward_impl.4} parent=5 // pred_fallthru
      _
    %p131 = scmp.lt.s32.totalorder %s8, 2
    // Predicated region
    $region17: #{_forward_impl.4} parent=5 // pred_check
      %p132 = pneg %p131
    $region18: #{_forward_impl.4} parent=5 // pred_check_branch
      %134 = sbr.rel (%p132) target = $region20
    $region19: #{_forward_impl.4} parent=5 // pred_region
      // Predicated region
      $region21: #{_forward_impl.4} parent=19 // pred_check
        %p135 = pneg %p49
      $region22: #{_forward_impl.4} parent=19 // pred_check_branch
        %137 = sbr.rel (%p135) target = $region24
      $region23: #{_forward_impl.4} parent=19 // pred_region
        %s138 = smul.u32 2, %s16
        %p139 = scmp.lt.s32.totalorder %s15, 1
        %s140 = scalar_select %p139, %s15, 1
        %p141 = scmp.lt.s32.totalorder %s138, 1
        %s142 = scalar_select %p141, %s138, 1
        %s143 = smul.addr %s140, 2
        %s144 = sadd.s32 %s142, %s143
        %s145 = smul.addr %s144, 8
        %s146 = scalar_lea.vmem %s0, %s145
        %s147 = smul.u32 2, %s16
      $region24: #{_forward_impl.4} parent=19 // pred_fallthru
        _
    $region20: #{_forward_impl.4} parent=5 // pred_fallthru
      _
    %p148 = scmp.le.s32.totalorder 1, %s8
    %p149 = scmp.lt.s32.totalorder %s8, 3
    %p150 = pnand %p148, %p149
    %p151 = pneg %p150
    // Predicated region
    $region25: #{_forward_impl.4} parent=5 // pred_check
      _
    $region26: #{_forward_impl.4} parent=5 // pred_check_branch
      %153 = sbr.rel (%p150) target = $region28
    $region27: #{_forward_impl.4} parent=5 // pred_region
      %s154 = ssub.s32 %s8, 1
      %s155 = smul.u32 2, %s19
      %p156 = scmp.lt.s32.totalorder %s18, 1
      %s157 = scalar_select %p156, %s18, 1
      %p158 = scmp.lt.s32.totalorder %s155, 1
      %s159 = scalar_select %p158, %s155, 1
      %s160 = smul.addr %s157, 2
      %s161 = sadd.s32 %s159, %s160
      %s162 = smul.addr %s161, 8
      %s163 = scalar_lea.vmem %s0, %s162
      %p164 = pneg %p55
      %p165 = pneg %p52
      %s166 = smul.u32 2, %s20
      %p167 = scmp.lt.s32.totalorder %s166, 1
      %s168 = scalar_select %p167, %s166, 1
      %s169 = smul.addr %s168, 8
      %s170 = scalar_lea.vmem %s1, %s169
      %p171 = pneg %p81
      %p172 = pneg %p78
      %p173 = pneg %p107
      %p174 = pneg %p104
      %p175 = scmp.lt.s32.totalorder %s18, 1
      %s176 = scalar_select %p175, %s18, 1
      %s177 = smul.addr %s176, 2
      %s178 = scalar_lea.vmem %s2, %s177
      %s179 = smul.u32 2, %s19
      %p180 = scmp.lt.s32.totalorder %s18, 1
      %s181 = scalar_select %p180, %s18, 1
      %p182 = scmp.lt.s32.totalorder %s179, 1
      %s183 = scalar_select %p182, %s179, 1
      %s184 = smul.addr %s181, 2
      %s185 = sadd.s32 %s183, %s184
      %s186 = smul.addr %s185, 8
      %s187 = scalar_lea.vmem %s0, %s186
      %s188 = smul.u32 2, %s19
      %s189 = smul.u32 2, %s20
      %p190 = scmp.lt.s32.totalorder %s189, 1
      %s191 = scalar_select %p190, %s189, 1
      %s192 = smul.addr %s191, 8
      %s193 = scalar_lea.vmem %s1, %s192
      %s194 = smul.u32 2, %s20
      %p195 = scmp.lt.s32.totalorder %s18, 1
      %s196 = scalar_select %p195, %s18, 1
      %s197 = smul.addr %s196, 2
      %s198 = scalar_lea.vmem %s2, %s197
      %p199 = scmp.eq.s32.totalorder %s19, 0
      %p200 = scmp.eq.s32.totalorder %s20, 0
      %p201 = pnand %p199, %p200
      %p202 = pneg %p201
      // Predicated region
      $region29: #{_forward_impl.4} parent=27 // pred_check
        _
      $region30: #{_forward_impl.4} parent=27 // pred_check_branch
        %204 = sbr.rel (%p201) target = $region32
      $region31: #{_forward_impl.4} parent=27 // pred_region
        %vm205 = vcmask 0
        %206 = vst.msk [vmem:[#allocation2] sm:$0x1] %vm205, 0.0
        %207 = vst.msk [vmem:[#allocation3] sm:$0x1] %vm205, 0.0
        %208 = vst.msk [vmem:[#allocation4] sm:$0x1] %vm205, 0.0
      $region32: #{_forward_impl.4} parent=27 // pred_fallthru
        _
      %v209 = vld [vmem:[%s187] sm:$0xff]
      %v210 = vld [vmem:[%s187 + $0x8] sm:$0xff]
      %v211 = vld [vmem:[%s193] sm:$0xff]
      %v212 = vld [vmem:[%s193 + $0x8] sm:$0xff]
      %v213 = vld [vmem:[%s193 + $0x10] sm:$0xff]
      %v214 = vld [vmem:[%s193 + $0x18] sm:$0xff]
      %vm215 = vcmask 130048
      %v217 = vsel %vm215, %v209, 0
      %v220 = vsel %vm215, %v210, 0
      %222 = vmatprep.subr.mxu0 0.0
      %223 = vmatpush1.msra.mxu0 0.0
      %224 = vmatprep.subr.mxu0 0.0
      %225 = vmatpush1.msra.mxu0 0.0
      %226 = vmatprep.subr.mxu0 0.0
      %227 = vmatpush1.msra.mxu0 0.0
      %228 = vmatprep.subr.mxu0 0.0
      %229 = vmatpush1.msra.mxu0 0.0
      %230 = vmatprep.subr.mxu0 0.0
      %231 = vmatpush1.msra.mxu0 0.0
      %232 = vmatprep.subr.mxu0 0.0
      %233 = vmatpush1.msra.mxu0 0.0
      %234 = vmatprep.subr.mxu0 0.0
      %235 = vmatpush1.msra.mxu0 0.0
      %236 = vmatprep.subr.mxu0 0.0
      %237 = vmatpush1.msra.mxu0 0.0
      %238 = vmatprep.subr.mxu0 0.0
      %239 = vmatpush1.msra.mxu0 0.0
      %240 = vmatprep.subr.mxu0 0.0
      %241 = vmatpush1.msra.mxu0 0.0
      %242 = vmatprep.subr.mxu0 0.0
      %243 = vmatpush1.msra.mxu0 0.0
      %244 = vmatprep.subr.mxu0 0.0
      %245 = vmatpush1.msra.mxu0 0.0
      %246 = vmatprep.subr.mxu0 0.0
      %247 = vmatpush1.msra.mxu0 0.0
      %248 = vmatprep.subr.mxu0 0.0
      %249 = vmatpush1.msra.mxu0 0.0
      %250 = vmatprep.subr.mxu0 %v214
      %251 = vmatpush1.msra.mxu0 %v213
      %252 = vmatprep.subr.mxu0 %v212
      %253 = vmatpush1.msra.mxu0 %v211
      %254 = vmatprep.subr.mxu0 0.0
      %255 = vmatpush2.msra.mxu0 0.0
      %256 = vmatprep.subr.mxu0 0.0
      %257 = vmatpush2.msra.mxu0 0.0
      %258 = vmatprep.subr.mxu0 0.0
      %259 = vmatpush2.msra.mxu0 0.0
      %260 = vmatprep.subr.mxu0 0.0
      %261 = vmatpush2.msra.mxu0 0.0
      %262 = vmatprep.subr.mxu0 0.0
      %263 = vmatpush2.msra.mxu0 0.0
      %264 = vmatprep.subr.mxu0 0.0
      %265 = vmatpush2.msra.mxu0 0.0
      %266 = vmatprep.subr.mxu0 0.0
      %267 = vmatpush2.msra.mxu0 0.0
      %268 = vmatprep.subr.mxu0 0.0
      %269 = vmatpush2.msra.mxu0 0.0
      %270 = vmatprep.subr.mxu0 0.0
      %271 = vmatpush2.msra.mxu0 0.0
      %272 = vmatprep.subr.mxu0 0.0
      %273 = vmatpush2.msra.mxu0 0.0
      %274 = vmatprep.subr.mxu0 0.0
      %275 = vmatpush2.msra.mxu0 0.0
      %276 = vmatprep.subr.mxu0 0.0
      %277 = vmatpush2.msra.mxu0 0.0
      %278 = vmatprep.subr.mxu0 0.0
      %279 = vmatpush2.msra.mxu0 0.0
      %280 = vmatprep.subr.mxu0 0.0
      %281 = vmatpush2.msra.mxu0 0.0
      %282 = vmatprep.subr.mxu0 0.0
      %283 = vmatpush2.msra.mxu0 0.0
      %284 = vmatprep.subr.mxu0 0.0
      %285 = vmatpush2.msra.mxu0 0.0
      %286 = vmatprep.mubr.f32.mxu0 0.0
      %287 = vmatmul.mubr.f32.gmra.mxu0 %v217
      %v288 = vpop.f32.mrf.mxu0
      %v289 = vadd.f32 0.0, %v288
      %v290 = vpop.f32.mrf.mxu0
      %v291 = vadd.f32 0.0, %v290
      %292 = vmatprep.mubr.f32.mxu0 0.0
      %293 = vmatmul.mubr.f32.gmra.mxu0 %v220
      %v294 = vpop.f32.mrf.mxu0
      %v295 = vadd.f32 0.0, %v294
      %v296 = vpop.f32.mrf.mxu0
      %v297 = vadd.f32 0.0, %v296
      %298 = vdwg.mxu0
      %v299 = vmul.f32 %v289, %v289
      %v300 = vmul.f32 %v295, %v295
      %v301 = vmul.f32 %v291, %v291
      %v302 = vmul.f32 %v297, %v297
      %v303 = vadd.f32 %v299, %v301
      %v304 = vadd.f32 %v300, %v302
      %v305 = vrsqrt.pop %v303
      %v306 = vmul.f32 %v303, %v305
      %vm307 = vcmp.eq.f32.partialorder %v303, inf
      %v308 = vsel %vm307, %v303, %v306
      %vm309 = vcmp.eq.f32.partialorder %v303, 0.0
      %v310 = vand.u32 %v303, 2147483648
      %v311 = vsel %vm309, %v310, %v308
      %v312 = vrsqrt.pop %v304
      %v313 = vmul.f32 %v304, %v312
      %vm314 = vcmp.eq.f32.partialorder %v304, inf
      %v315 = vsel %vm314, %v304, %v313
      %vm316 = vcmp.eq.f32.partialorder %v304, 0.0
      %v317 = vand.u32 %v304, 2147483648
      %v318 = vsel %vm316, %v317, %v315
      %v319 = vadd.f32 %v311, 1e-07
      %v320 = vadd.f32 %v318, 1e-07
      %v321 = vsub.f32 %v319, %v320
      %v322 = vadd.f32 %v319, %v320
      %s323 = smul.u32 %s19, 8
      %v324 = vlaneseq
      %v325 = vshrl.u32 %v324, 7
      %v326 = vstv %s323
      %v327 = vadd.s32 %v326, %v325
      %s328 = smul.u32 %s20, 128
      %v329 = vlaneseq
      %v330 = vand.u32 %v329, 127
      %v331 = vstv %s328
      %v332 = vadd.s32 %v331, %v330
      %vm333 = vcmp.lt.s32.totalorder %v327, 8
      %vm334 = vcmp.lt.s32.totalorder %v332, 9
      %vm335 = vmand %vm333, %vm334
      %v336 = vsel %vm335, 1, 0
      %v337 = vcvt.s32.f32 %v336
      %v338 = vld [vmem:[#allocation2] sm:$0x1]
      %v339 = vmul.f32 %v321, %v321
      %340 = vadd.xlane.f32.xlu0 %v339
      %v341 = vpop.xlane.xlu0 %340
      %v342 = vrot.slane %v341, 4
      %v343 = vadd.f32 %v341, %v342
      %v344 = vrot.slane %v343, 2
      %v345 = vadd.f32 %v343, %v344
      %v346 = vrot.slane %v345, 1
      %v347 = vadd.f32 %v345, %v346
      %s348 = vtos %v347
      %v349 = vstv %s348
      %v350 = vadd.f32 %v338, %v349
      %vm351 = vcmask 0
      %352 = vst.msk [vmem:[#allocation2] sm:$0x1] %vm351, %v350
      %v353 = vld [vmem:[#allocation3] sm:$0x1]
      %v354 = vmul.f32 %v322, %v322
      %v355 = vmul.f32 %v354, %v337
      %356 = vadd.xlane.f32.xlu0 %v355
      %v357 = vpop.xlane.xlu0 %356
      %v358 = vrot.slane %v357, 4
      %v359 = vadd.f32 %v357, %v358
      %v360 = vrot.slane %v359, 2
      %v361 = vadd.f32 %v359, %v360
      %v362 = vrot.slane %v361, 1
      %v363 = vadd.f32 %v361, %v362
      %s364 = vtos %v363
      %v365 = vstv %s364
      %v366 = vadd.f32 %v353, %v365
      %367 = vst.msk [vmem:[#allocation3] sm:$0x1] %vm351, %v366
      %v368 = vld [vmem:[#allocation4] sm:$0x1]
      %v369 = vlog2.pop %v319
      %v370 = vmul.f32 %v369, 0.6931472
      %v371 = vlog2.pop %v320
      %v372 = vmul.f32 %v371, 0.6931472
      %v373 = vsub.f32 %v370, %v372
      %v374 = vand.u32 2147483647, %v373
      %375 = vadd.xlane.f32.xlu0 %v374
      %v376 = vpop.xlane.xlu0 %375
      %v377 = vrot.slane %v376, 4
      %v378 = vadd.f32 %v376, %v377
      %v379 = vrot.slane %v378, 2
      %v380 = vadd.f32 %v378, %v379
      %v381 = vrot.slane %v380, 1
      %v382 = vadd.f32 %v380, %v381
      %s383 = vtos %v382
      %v384 = vstv %s383
      %v385 = vadd.f32 %v368, %v384
      %386 = vst.msk [vmem:[#allocation4] sm:$0x1] %vm351, %v385
      // Predicated region
      $region33: #{_forward_impl.4} parent=27 // pred_check
        _
      $region34: #{_forward_impl.4} parent=27 // pred_check_branch
        %388 = sbr.rel (%p201) target = $region36
      $region35: #{_forward_impl.4} parent=27 // pred_region
        %v389 = vld [vmem:[#allocation2] sm:$0x1]
        %v390 = vrsqrt.pop %v389
        %v391 = vmul.f32 %v389, %v390
        %vm392 = vcmp.eq.f32.partialorder %v389, inf
        %v393 = vsel %vm392, %v389, %v391
        %vm394 = vcmp.eq.f32.partialorder %v389, 0.0
        %v395 = vand.u32 %v389, 2147483648
        %v396 = vsel %vm394, %v395, %v393
        %v397 = vld [vmem:[#allocation3] sm:$0x1]
        %v398 = vrsqrt.pop %v397
        %v399 = vmul.f32 %v396, %v398
        %v401 = vlaneseq
        %v402 = vshrl.u32 %v401, 7
        %v403 = vsub.s32 0, %v402
        %v404 = vrot.slane %v399, %v403
        %405 = vset.pattern.permute.xlu0 0
        %406 = vperm.xlu0 %405, %v404
        %v407 = vpop.permute.xlu0 %406
        %v409 = vld [vmem:[#allocation4] sm:$0x1]
        %v411 = vlaneseq
        %v412 = vshrl.u32 %v411, 7
        %v413 = vsub.s32 0, %v412
        %v414 = vrot.slane %v409, %v413
        %415 = vset.pattern.permute.xlu0 0
        %416 = vperm.xlu0 %415, %v414
        %v417 = vpop.permute.xlu0 %416
        %vm419 = vcmp.eq.s32.totalorder %v325, 0
        %v420 = vsel %vm419, %v407, %v417
        %421 = vst [vmem:[%s198] sm:$0x3] %v420
      $region36: #{_forward_impl.4} parent=27 // pred_fallthru
        _
      %p422 = scmp.lt.s32.totalorder %s18, 1
      %s423 = scalar_select %p422, %s18, 1
      %s424 = smul.addr %s423, 2
      %s425 = scalar_lea.vmem %s2, %s424
      // Predicated region
      $region37: #{_forward_impl.4} parent=27 // pred_check
        %p426 = pneg %p104
      $region38: #{_forward_impl.4} parent=27 // pred_check_branch
        %428 = sbr.rel (%p426) target = $region40
      $region39: #{_forward_impl.4} parent=27 // pred_region
        _
      $region40: #{_forward_impl.4} parent=27 // pred_fallthru
        _
    $region28: #{_forward_impl.4} parent=5 // pred_fallthru
      _
    %p429 = scmp.le.s32.totalorder 2, %s8
    // Predicated region
    $region41: #{_forward_impl.4} parent=5 // pred_check
      %p430 = pneg %p429
    $region42: #{_forward_impl.4} parent=5 // pred_check_branch
      %432 = sbr.rel (%p430) target = $region44
    $region43: #{_forward_impl.4} parent=5 // pred_region
      %s433 = ssub.s32 %s8, 2
      // Predicated region
      $region45: #{_forward_impl.4} parent=43 // pred_check
        %p434 = pneg %p110
      $region46: #{_forward_impl.4} parent=43 // pred_check_branch
        %436 = sbr.rel (%p434) target = $region48
      $region47: #{_forward_impl.4} parent=43 // pred_region
        %p437 = scmp.lt.s32.totalorder %s21, 1
        %s438 = scalar_select %p437, %s21, 1
        %s439 = smul.addr %s438, 2
        %s440 = scalar_lea.vmem %s2, %s439
      $region48: #{_forward_impl.4} parent=43 // pred_fallthru
        _
    $region44: #{_forward_impl.4} parent=5 // pred_fallthru
      _
  $region6: #{_forward_impl.4} parent=0 // loop_footer
    %s12 = sadd.s32 1, %s8
  $region7: #{_forward_impl.4} parent=0 // loop_footer_branch
    %7 = sbr.rel target = $region3
  $region8: #{_forward_impl.4} parent=0 // loop_exit
    _

// kernel: _forward_impl.3
$region0: #{_forward_impl.3}
  #allocation0 [shape = 'u32[]', space=smem, size = 0x4, offset = 0x4, fixed_abs, tag = 'smem constant byte address 0x4 - core index']
  #allocation1 [shape = 'u32[144,128]{1,0:T(1,128)}', space=vmem, size = 0x12000, scoped, tag = 'internal scratch']
  #allocation2 [shape = 'f32[1,1]{1,0:T(1,128)}', space=vmem, size = 0x200, scoped, tag = 'scratch operand']
  #allocation3 [shape = 'f32[1,1]{1,0:T(1,128)}', space=vmem, size = 0x200, scoped, tag = 'scratch operand']
  #allocation4 [shape = 'f32[1,1]{1,0:T(1,128)}', space=vmem, size = 0x200, scoped, tag = 'scratch operand']
  %s0 = inlined_call_operand.vmem [shape: f32[2,16,17], index: 0, kind: input, shape index: {}]
  %s1 = inlined_call_operand.vmem [shape: f32[17,256], index: 1, kind: input, shape index: {}]
  %s2 = inlined_call_operand.vmem [shape: f32[2,2,128], index: 2, kind: output, shape index: {}]
  %s3 = sld [smem:[#allocation0]]
  $region49: #{_forward_impl.3} parent=0
    _
  %s5 = ssub.s32 1, %s3
  %s6 = scalar_select 0, %s5, %s3
  loop: start=0, step=1, limit=4
  $region2: #{_forward_impl.3} parent=0 // loop_pre_header
    _
  $region3: #{_forward_impl.3} parent=0 // loop_header
    %s8 = sphi 0, %s12
    %p9 = scmp.ge.s32.totalorder %s8, 4
    %s15 = sphi 0, %s34
    %s16 = sphi 0, %s30
    %s17 = sphi 0, %s26
    %s18 = sphi 0, %s15
    %s19 = sphi 0, %s16
    %s20 = sphi 0, %s17
    %s21 = sphi 0, %s18
    %s22 = sphi 0, %s19
    %s23 = sphi 0, %s20
    %s39 = sphi 0, %s41
    %s42 = sphi 0, %s39
    %s43 = sphi 0, %s42
    %s59 = sphi 0, %s43
    %s65 = sphi 0, %s67
    %s68 = sphi 0, %s65
    %s69 = sphi 0, %s68
    %s85 = sphi 0, %s69
    %s91 = sphi 0, %s93
    %s94 = sphi 0, %s91
    %s95 = sphi 0, %s94
    %s111 = sphi 0, %s95
  $region4: #{_forward_impl.3} parent=0 // loop_header_branch
    %11 = sbr.rel (%p9) target = $region8
  $region5: #{_forward_impl.3} parent=0 // loop_body
    %s13 = ssub.s32 %s8, 1
    %s14 = ssub.s32 %s8, 2
    %s24 = sadd.s32 1, %s17
    %p25 = scmp.ge.s32.totalorder %s24, 1
    %s26 = scalar_select %p25, 0, %s24
    %s27 = sadd.s32 1, %s16
    %s28 = scalar_select %p25, %s27, %s16
    %p29 = scmp.ge.s32.totalorder %s28, 1
    %s30 = scalar_select %p29, 0, %s28
    %s31 = sadd.s32 1, %s15
    %s32 = scalar_select %p29, %s31, %s15
    %p33 = scmp.ge.s32.totalorder %s32, 2
    %s34 = scalar_select %p33, 0, %s32
    %s35 = ssub.s32 %s15, %s34
    %s36 = ssub.s32 %s16, %s30
    %s37 = sor.u32 %s35, %s36
    %p38 = scmp.eq.s32.totalorder %s37, 0
    %s40 = sadd.s32 %s39, 1
    %s41 = scalar_select %p38, %s39, %s40
    %p44 = pneg %p38
    %p45 = scmp.eq.s32.totalorder %s8, 1
    %p46 = por %p44, %p45
    %p47 = scmp.ne.s32.totalorder %s39, %s42
    %p48 = scmp.eq.s32.totalorder %s8, 0
    %p49 = por %p47, %p48
    %p50 = scmp.ne.s32.totalorder %s39, %s42
    %p51 = scmp.eq.s32.totalorder %s13, 1
    %p52 = por %p50, %p51
    %p53 = scmp.ne.s32.totalorder %s42, %s43
    %p54 = scmp.eq.s32.totalorder %s13, 0
    %p55 = por %p53, %p54
    %p56 = scmp.ne.s32.totalorder %s42, %s43
    %p57 = scmp.eq.s32.totalorder %s14, 1
    %p58 = por %p56, %p57
    %p60 = scmp.ne.s32.totalorder %s43, %s59
    %p61 = scmp.eq.s32.totalorder %s14, 0
    %p62 = por %p60, %p61
    %s63 = ssub.s32 %s17, %s26
    %p64 = scmp.eq.s32.totalorder %s63, 0
    %s66 = sadd.s32 %s65, 1
    %s67 = scalar_select %p64, %s65, %s66
    %p70 = pneg %p64
    %p71 = scmp.eq.s32.totalorder %s8, 1
    %p72 = por %p70, %p71
    %p73 = scmp.ne.s32.totalorder %s65, %s68
    %p74 = scmp.eq.s32.totalorder %s8, 0
    %p75 = por %p73, %p74
    %p76 = scmp.ne.s32.totalorder %s65, %s68
    %p77 = scmp.eq.s32.totalorder %s13, 1
    %p78 = por %p76, %p77
    %p79 = scmp.ne.s32.totalorder %s68, %s69
    %p80 = scmp.eq.s32.totalorder %s13, 0
    %p81 = por %p79, %p80
    %p82 = scmp.ne.s32.totalorder %s68, %s69
    %p83 = scmp.eq.s32.totalorder %s14, 1
    %p84 = por %p82, %p83
    %p86 = scmp.ne.s32.totalorder %s69, %s85
    %p87 = scmp.eq.s32.totalorder %s14, 0
    %p88 = por %p86, %p87
    %s89 = ssub.s32 %s15, %s34
    %p90 = scmp.eq.s32.totalorder %s89, 0
    %s92 = sadd.s32 %s91, 1
    %s93 = scalar_select %p90, %s91, %s92
    %p96 = pneg %p90
    %p97 = scmp.eq.s32.totalorder %s8, 1
    %p98 = por %p96, %p97
    %p99 = scmp.ne.s32.totalorder %s91, %s94
    %p100 = scmp.eq.s32.totalorder %s8, 0
    %p101 = por %p99, %p100
    %p102 = scmp.ne.s32.totalorder %s91, %s94
    %p103 = scmp.eq.s32.totalorder %s13, 1
    %p104 = por %p102, %p103
    %p105 = scmp.ne.s32.totalorder %s94, %s95
    %p106 = scmp.eq.s32.totalorder %s13, 0
    %p107 = por %p105, %p106
    %p108 = scmp.ne.s32.totalorder %s94, %s95
    %p109 = scmp.eq.s32.totalorder %s14, 1
    %p110 = por %p108, %p109
    %p112 = scmp.ne.s32.totalorder %s95, %s111
    %p113 = scmp.eq.s32.totalorder %s14, 0
    %p114 = por %p112, %p113
    %p115 = scmp.le.s32.totalorder 1, %s8
    %p116 = scmp.lt.s32.totalorder %s8, 3
    %p117 = pnand %p115, %p116
    %p118 = pneg %p117
    // Predicated region
    $region9: #{_forward_impl.3} parent=5 // pred_check
      _
    $region10: #{_forward_impl.3} parent=5 // pred_check_branch
      %120 = sbr.rel (%p117) target = $region12
    $region11: #{_forward_impl.3} parent=5 // pred_region
      %s121 = ssub.s32 %s8, 1
      // Predicated region
      $region13: #{_forward_impl.3} parent=11 // pred_check
        %p122 = pneg %p81
      $region14: #{_forward_impl.3} parent=11 // pred_check_branch
        %124 = sbr.rel (%p122) target = $region16
      $region15: #{_forward_impl.3} parent=11 // pred_region
        %s125 = smul.u32 2, %s20
        %p126 = scmp.lt.s32.totalorder %s125, 1
        %s127 = scalar_select %p126, %s125, 1
        %s128 = smul.addr %s127, 8
        %s129 = scalar_lea.vmem %s1, %s128
        %s130 = smul.u32 2, %s20
      $region16: #{_forward_impl.3} parent=11 // pred_fallthru
        _
    $region12: #{_forward_impl.3} parent=5 // pred_fallthru
      _
    %p131 = scmp.lt.s32.totalorder %s8, 2
    // Predicated region
    $region17: #{_forward_impl.3} parent=5 // pred_check
      %p132 = pneg %p131
    $region18: #{_forward_impl.3} parent=5 // pred_check_branch
      %134 = sbr.rel (%p132) target = $region20
    $region19: #{_forward_impl.3} parent=5 // pred_region
      // Predicated region
      $region21: #{_forward_impl.3} parent=19 // pred_check
        %p135 = pneg %p49
      $region22: #{_forward_impl.3} parent=19 // pred_check_branch
        %137 = sbr.rel (%p135) target = $region24
      $region23: #{_forward_impl.3} parent=19 // pred_region
        %s138 = smul.u32 2, %s16
        %p139 = scmp.lt.s32.totalorder %s15, 1
        %s140 = scalar_select %p139, %s15, 1
        %p141 = scmp.lt.s32.totalorder %s138, 1
        %s142 = scalar_select %p141, %s138, 1
        %s143 = smul.addr %s140, 2
        %s144 = sadd.s32 %s142, %s143
        %s145 = smul.addr %s144, 8
        %s146 = scalar_lea.vmem %s0, %s145
        %s147 = smul.u32 2, %s16
      $region24: #{_forward_impl.3} parent=19 // pred_fallthru
        _
    $region20: #{_forward_impl.3} parent=5 // pred_fallthru
      _
    %p148 = scmp.le.s32.totalorder 1, %s8
    %p149 = scmp.lt.s32.totalorder %s8, 3
    %p150 = pnand %p148, %p149
    %p151 = pneg %p150
    // Predicated region
    $region25: #{_forward_impl.3} parent=5 // pred_check
      _
    $region26: #{_forward_impl.3} parent=5 // pred_check_branch
      %153 = sbr.rel (%p150) target = $region28
    $region27: #{_forward_impl.3} parent=5 // pred_region
      %s154 = ssub.s32 %s8, 1
      %s155 = smul.u32 2, %s19
      %p156 = scmp.lt.s32.totalorder %s18, 1
      %s157 = scalar_select %p156, %s18, 1
      %p158 = scmp.lt.s32.totalorder %s155, 1
      %s159 = scalar_select %p158, %s155, 1
      %s160 = smul.addr %s157, 2
      %s161 = sadd.s32 %s159, %s160
      %s162 = smul.addr %s161, 8
      %s163 = scalar_lea.vmem %s0, %s162
      %p164 = pneg %p55
      %p165 = pneg %p52
      %s166 = smul.u32 2, %s20
      %p167 = scmp.lt.s32.totalorder %s166, 1
      %s168 = scalar_select %p167, %s166, 1
      %s169 = smul.addr %s168, 8
      %s170 = scalar_lea.vmem %s1, %s169
      %p171 = pneg %p81
      %p172 = pneg %p78
      %p173 = pneg %p107
      %p174 = pneg %p104
      %p175 = scmp.lt.s32.totalorder %s18, 1
      %s176 = scalar_select %p175, %s18, 1
      %s177 = smul.addr %s176, 2
      %s178 = scalar_lea.vmem %s2, %s177
      %s179 = smul.u32 2, %s19
      %p180 = scmp.lt.s32.totalorder %s18, 1
      %s181 = scalar_select %p180, %s18, 1
      %p182 = scmp.lt.s32.totalorder %s179, 1
      %s183 = scalar_select %p182, %s179, 1
      %s184 = smul.addr %s181, 2
      %s185 = sadd.s32 %s183, %s184
      %s186 = smul.addr %s185, 8
      %s187 = scalar_lea.vmem %s0, %s186
      %s188 = smul.u32 2, %s19
      %s189 = smul.u32 2, %s20
      %p190 = scmp.lt.s32.totalorder %s189, 1
      %s191 = scalar_select %p190, %s189, 1
      %s192 = smul.addr %s191, 8
      %s193 = scalar_lea.vmem %s1, %s192
      %s194 = smul.u32 2, %s20
      %p195 = scmp.lt.s32.totalorder %s18, 1
      %s196 = scalar_select %p195, %s18, 1
      %s197 = smul.addr %s196, 2
      %s198 = scalar_lea.vmem %s2, %s197
      %p199 = scmp.eq.s32.totalorder %s19, 0
      %p200 = scmp.eq.s32.totalorder %s20, 0
      %p201 = pnand %p199, %p200
      %p202 = pneg %p201
      // Predicated region
      $region29: #{_forward_impl.3} parent=27 // pred_check
        _
      $region30: #{_forward_impl.3} parent=27 // pred_check_branch
        %204 = sbr.rel (%p201) target = $region32
      $region31: #{_forward_impl.3} parent=27 // pred_region
        %vm205 = vcmask 0
        %206 = vst.msk [vmem:[#allocation2] sm:$0x1] %vm205, 0.0
        %207 = vst.msk [vmem:[#allocation3] sm:$0x1] %vm205, 0.0
        %208 = vst.msk [vmem:[#allocation4] sm:$0x1] %vm205, 0.0
      $region32: #{_forward_impl.3} parent=27 // pred_fallthru
        _
      %v209 = vld [vmem:[%s187] sm:$0xff]
      %v210 = vld [vmem:[%s187 + $0x8] sm:$0xff]
      %v211 = vld [vmem:[%s193] sm:$0xff]
      %v212 = vld [vmem:[%s193 + $0x8] sm:$0xff]
      %v213 = vld [vmem:[%s193 + $0x10] sm:$0xff]
      %v214 = vld [vmem:[%s193 + $0x18] sm:$0xff]
      %v215 = vld [vmem:[%s193 + $0x20] sm:$0x1]
      %v216 = vld [vmem:[%s193 + $0x28] sm:$0x1]
      %vm217 = vcmask 138240
      %v219 = vsel %vm217, %v209, 0
      %v222 = vsel %vm217, %v210, 0
      %vm224 = vcmask 1040384
      %v226 = vsel %vm224, %v215, 0
      %v229 = vsel %vm224, %v216, 0
      %231 = vmatprep.subr.mxu0 0.0
      %232 = vmatpush1.msra.mxu0 0.0
      %233 = vmatprep.subr.mxu0 0.0
      %234 = vmatpush1.msra.mxu0 0.0
      %235 = vmatprep.subr.mxu0 0.0
      %236 = vmatpush1.msra.mxu0 0.0
      %237 = vmatprep.subr.mxu0 0.0
      %238 = vmatpush1.msra.mxu0 0.0
      %239 = vmatprep.subr.mxu0 0.0
      %240 = vmatpush1.msra.mxu0 0.0
      %241 = vmatprep.subr.mxu0 0.0
      %242 = vmatpush1.msra.mxu0 0.0
      %243 = vmatprep.subr.mxu0 0.0
      %244 = vmatpush1.msra.mxu0 0.0
      %245 = vmatprep.subr.mxu0 0.0
      %246 = vmatpush1.msra.mxu0 0.0
      %247 = vmatprep.subr.mxu0 0.0
      %248 = vmatpush1.msra.mxu0 0.0
      %249 = vmatprep.subr.mxu0 0.0
      %250 = vmatpush1.msra.mxu0 0.0
      %251 = vmatprep.subr.mxu0 0.0
      %252 = vmatpush1.msra.mxu0 0.0
      %253 = vmatprep.subr.mxu0 0.0
      %254 = vmatpush1.msra.mxu0 0.0
      %255 = vmatprep.subr.mxu0 0.0
      %256 = vmatpush1.msra.mxu0 0.0
      %257 = vmatprep.subr.mxu0 %v229
      %258 = vmatpush1.msra.mxu0 %v226
      %259 = vmatprep.subr.mxu0 %v214
      %260 = vmatpush1.msra.mxu0 %v213
      %261 = vmatprep.subr.mxu0 %v212
      %262 = vmatpush1.msra.mxu0 %v211
      %263 = vmatprep.subr.mxu0 0.0
      %264 = vmatpush2.msra.mxu0 0.0
      %265 = vmatprep.subr.mxu0 0.0
      %266 = vmatpush2.msra.mxu0 0.0
      %267 = vmatprep.subr.mxu0 0.0
      %268 = vmatpush2.msra.mxu0 0.0
      %269 = vmatprep.subr.mxu0 0.0
      %270 = vmatpush2.msra.mxu0 0.0
      %271 = vmatprep.subr.mxu0 0.0
      %272 = vmatpush2.msra.mxu0 0.0
      %273 = vmatprep.subr.mxu0 0.0
      %274 = vmatpush2.msra.mxu0 0.0
      %275 = vmatprep.subr.mxu0 0.0
      %276 = vmatpush2.msra.mxu0 0.0
      %277 = vmatprep.subr.mxu0 0.0
      %278 = vmatpush2.msra.mxu0 0.0
      %279 = vmatprep.subr.mxu0 0.0
      %280 = vmatpush2.msra.mxu0 0.0
      %281 = vmatprep.subr.mxu0 0.0
      %282 = vmatpush2.msra.mxu0 0.0
      %283 = vmatprep.subr.mxu0 0.0
      %284 = vmatpush2.msra.mxu0 0.0
      %285 = vmatprep.subr.mxu0 0.0
      %286 = vmatpush2.msra.mxu0 0.0
      %287 = vmatprep.subr.mxu0 0.0
      %288 = vmatpush2.msra.mxu0 0.0
      %289 = vmatprep.subr.mxu0 0.0
      %290 = vmatpush2.msra.mxu0 0.0
      %291 = vmatprep.subr.mxu0 0.0
      %292 = vmatpush2.msra.mxu0 0.0
      %293 = vmatprep.subr.mxu0 0.0
      %294 = vmatpush2.msra.mxu0 0.0
      %295 = vmatprep.mubr.f32.mxu0 0.0
      %296 = vmatmul.mubr.f32.gmra.mxu0 %v219
      %v297 = vpop.f32.mrf.mxu0
      %v298 = vadd.f32 0.0, %v297
      %v299 = vpop.f32.mrf.mxu0
      %v300 = vadd.f32 0.0, %v299
      %301 = vmatprep.mubr.f32.mxu0 0.0
      %302 = vmatmul.mubr.f32.gmra.mxu0 %v222
      %v303 = vpop.f32.mrf.mxu0
      %v304 = vadd.f32 0.0, %v303
      %v305 = vpop.f32.mrf.mxu0
      %v306 = vadd.f32 0.0, %v305
      %307 = vdwg.mxu0
      %v308 = vmul.f32 %v298, %v298
      %v309 = vmul.f32 %v304, %v304
      %v310 = vmul.f32 %v300, %v300
      %v311 = vmul.f32 %v306, %v306
      %v312 = vadd.f32 %v308, %v310
      %v313 = vadd.f32 %v309, %v311
      %v314 = vrsqrt.pop %v312
      %v315 = vmul.f32 %v312, %v314
      %vm316 = vcmp.eq.f32.partialorder %v312, inf
      %v317 = vsel %vm316, %v312, %v315
      %vm318 = vcmp.eq.f32.partialorder %v312, 0.0
      %v319 = vand.u32 %v312, 2147483648
      %v320 = vsel %vm318, %v319, %v317
      %v321 = vrsqrt.pop %v313
      %v322 = vmul.f32 %v313, %v321
      %vm323 = vcmp.eq.f32.partialorder %v313, inf
      %v324 = vsel %vm323, %v313, %v322
      %vm325 = vcmp.eq.f32.partialorder %v313, 0.0
      %v326 = vand.u32 %v313, 2147483648
      %v327 = vsel %vm325, %v326, %v324
      %v328 = vadd.f32 %v320, 1e-07
      %v329 = vadd.f32 %v327, 1e-07
      %v330 = vsub.f32 %v328, %v329
      %v331 = vadd.f32 %v328, %v329
      %s332 = smul.u32 %s19, 8
      %v333 = vlaneseq
      %v334 = vshrl.u32 %v333, 7
      %v335 = vstv %s332
      %v336 = vadd.s32 %v335, %v334
      %s337 = smul.u32 %s20, 128
      %v338 = vlaneseq
      %v339 = vand.u32 %v338, 127
      %v340 = vstv %s337
      %v341 = vadd.s32 %v340, %v339
      %vm342 = vcmp.lt.s32.totalorder %v336, 7
      %vm343 = vcmp.lt.s32.totalorder %v341, 9
      %vm344 = vmand %vm342, %vm343
      %v345 = vsel %vm344, 1, 0
      %v346 = vcvt.s32.f32 %v345
      %v347 = vld [vmem:[#allocation2] sm:$0x1]
      %v348 = vmul.f32 %v330, %v330
      %349 = vadd.xlane.f32.xlu0 %v348
      %v350 = vpop.xlane.xlu0 %349
      %v351 = vrot.slane %v350, 4
      %v352 = vadd.f32 %v350, %v351
      %v353 = vrot.slane %v352, 2
      %v354 = vadd.f32 %v352, %v353
      %v355 = vrot.slane %v354, 1
      %v356 = vadd.f32 %v354, %v355
      %s357 = vtos %v356
      %v358 = vstv %s357
      %v359 = vadd.f32 %v347, %v358
      %vm360 = vcmask 0
      %361 = vst.msk [vmem:[#allocation2] sm:$0x1] %vm360, %v359
      %v362 = vld [vmem:[#allocation3] sm:$0x1]
      %v363 = vmul.f32 %v331, %v331
      %v364 = vmul.f32 %v363, %v346
      %365 = vadd.xlane.f32.xlu0 %v364
      %v366 = vpop.xlane.xlu0 %365
      %v367 = vrot.slane %v366, 4
      %v368 = vadd.f32 %v366, %v367
      %v369 = vrot.slane %v368, 2
      %v370 = vadd.f32 %v368, %v369
      %v371 = vrot.slane %v370, 1
      %v372 = vadd.f32 %v370, %v371
      %s373 = vtos %v372
      %v374 = vstv %s373
      %v375 = vadd.f32 %v362, %v374
      %376 = vst.msk [vmem:[#allocation3] sm:$0x1] %vm360, %v375
      %v377 = vld [vmem:[#allocation4] sm:$0x1]
      %v378 = vlog2.pop %v328
      %v379 = vmul.f32 %v378, 0.6931472
      %v380 = vlog2.pop %v329
      %v381 = vmul.f32 %v380, 0.6931472
      %v382 = vsub.f32 %v379, %v381
      %v383 = vand.u32 2147483647, %v382
      %384 = vadd.xlane.f32.xlu0 %v383
      %v385 = vpop.xlane.xlu0 %384
      %v386 = vrot.slane %v385, 4
      %v387 = vadd.f32 %v385, %v386
      %v388 = vrot.slane %v387, 2
      %v389 = vadd.f32 %v387, %v388
      %v390 = vrot.slane %v389, 1
      %v391 = vadd.f32 %v389, %v390
      %s392 = vtos %v391
      %v393 = vstv %s392
      %v394 = vadd.f32 %v377, %v393
      %395 = vst.msk [vmem:[#allocation4] sm:$0x1] %vm360, %v394
      // Predicated region
      $region33: #{_forward_impl.3} parent=27 // pred_check
        _
      $region34: #{_forward_impl.3} parent=27 // pred_check_branch
        %397 = sbr.rel (%p201) target = $region36
      $region35: #{_forward_impl.3} parent=27 // pred_region
        %v398 = vld [vmem:[#allocation2] sm:$0x1]
        %v399 = vrsqrt.pop %v398
        %v400 = vmul.f32 %v398, %v399
        %vm401 = vcmp.eq.f32.partialorder %v398, inf
        %v402 = vsel %vm401, %v398, %v400
        %vm403 = vcmp.eq.f32.partialorder %v398, 0.0
        %v404 = vand.u32 %v398, 2147483648
        %v405 = vsel %vm403, %v404, %v402
        %v406 = vld [vmem:[#allocation3] sm:$0x1]
        %v407 = vrsqrt.pop %v406
        %v408 = vmul.f32 %v405, %v407
        %v410 = vlaneseq
        %v411 = vshrl.u32 %v410, 7
        %v412 = vsub.s32 0, %v411
        %v413 = vrot.slane %v408, %v412
        %414 = vset.pattern.permute.xlu0 0
        %415 = vperm.xlu0 %414, %v413
        %v416 = vpop.permute.xlu0 %415
        %v418 = vld [vmem:[#allocation4] sm:$0x1]
        %v420 = vlaneseq
        %v421 = vshrl.u32 %v420, 7
        %v422 = vsub.s32 0, %v421
        %v423 = vrot.slane %v418, %v422
        %424 = vset.pattern.permute.xlu0 0
        %425 = vperm.xlu0 %424, %v423
        %v426 = vpop.permute.xlu0 %425
        %vm428 = vcmp.eq.s32.totalorder %v334, 0
        %v429 = vsel %vm428, %v416, %v426
        %430 = vst [vmem:[%s198] sm:$0x3] %v429
      $region36: #{_forward_impl.3} parent=27 // pred_fallthru
        _
      %p431 = scmp.lt.s32.totalorder %s18, 1
      %s432 = scalar_select %p431, %s18, 1
      %s433 = smul.addr %s432, 2
      %s434 = scalar_lea.vmem %s2, %s433
      // Predicated region
      $region37: #{_forward_impl.3} parent=27 // pred_check
        %p435 = pneg %p104
      $region38: #{_forward_impl.3} parent=27 // pred_check_branch
        %437 = sbr.rel (%p435) target = $region40
      $region39: #{_forward_impl.3} parent=27 // pred_region
        _
      $region40: #{_forward_impl.3} parent=27 // pred_fallthru
        _
    $region28: #{_forward_impl.3} parent=5 // pred_fallthru
      _
    %p438 = scmp.le.s32.totalorder 2, %s8
    // Predicated region
    $region41: #{_forward_impl.3} parent=5 // pred_check
      %p439 = pneg %p438
    $region42: #{_forward_impl.3} parent=5 // pred_check_branch
      %441 = sbr.rel (%p439) target = $region44
    $region43: #{_forward_impl.3} parent=5 // pred_region
      %s442 = ssub.s32 %s8, 2
      // Predicated region
      $region45: #{_forward_impl.3} parent=43 // pred_check
        %p443 = pneg %p110
      $region46: #{_forward_impl.3} parent=43 // pred_check_branch
        %445 = sbr.rel (%p443) target = $region48
      $region47: #{_forward_impl.3} parent=43 // pred_region
        %p446 = scmp.lt.s32.totalorder %s21, 1
        %s447 = scalar_select %p446, %s21, 1
        %s448 = smul.addr %s447, 2
        %s449 = scalar_lea.vmem %s2, %s448
      $region48: #{_forward_impl.3} parent=43 // pred_fallthru
        _
    $region44: #{_forward_impl.3} parent=5 // pred_fallthru
      _
  $region6: #{_forward_impl.3} parent=0 // loop_footer
    %s12 = sadd.s32 1, %s8
  $region7: #{_forward_impl.3} parent=0 // loop_footer_branch
    %7 = sbr.rel target = $region3
  $region8: #{_forward_impl.3} parent=0 // loop_exit
    _

</llo_original>
